<compile_context>
chip_gen: v7x
topology: tpu7x:2x2x1
jax: 0.10.0
libtpu: 0.0.40
codegen_flags: <defaults>
</compile_context>

<pallas_src>
import jax
import jax.numpy as jnp
import numpy as np
from jax import lax
from jax.experimental import pallas as pl
from jax.experimental.pallas import tpu as pltpu

# ----------------------- model hyper-parameters (small) ----------------------
VOCAB = 50        # vocab_size
EMB = 16          # embedding_dim
HID = 32          # hidden_dim
MAX_LEN = 8       # max_len (T)
NUM_TAGS = 5      # num_tags (K)
BATCH = 2         # batch_size
DROPOUT = 0.1     # dropout_prob (eval-mode identity)

BP = 8            # batch padded to one sublane tile
KP = 128          # tag lanes padded to one lane tile
G = 4 * HID       # 128: per-direction gate width (lane order [ i | g | o | f ])
W = 2 * G         # 256: both directions, fwd lanes [0,G), bwd lanes [G,2G)


def _lane_roll(x, k):
    """Static circular shift toward higher lanes: out[:, j] = x[:, (j - k) % W]."""
    return jnp.concatenate([x[:, W - k:], x[:, :W - k]], axis=1)


# --------------------------------- kernel ------------------------------------
def bilstm_kernel(len_ref, gall_ref, whh_ref, wlin_ref, blin_ref, out_ref, feats_ref):
    T, H = MAX_LEN, HID
    lengths = len_ref[...]                                   # (BP, 1) int32

    # ---- hoisted per-lane activation constants -------------------------------
    # per direction the gate lanes are ordered [ i | g | o | f ]; g uses tanh,
    # the rest sigmoid, folded into ONE tanh: sigmoid(x) = 0.5 + 0.5*tanh(x/2).
    lane = lax.broadcasted_iota(jnp.int32, (BP, W), 1)
    lane_dir = lane % G
    is_g = jnp.logical_and(lane_dir >= H, lane_dir < 2 * H)
    s_vec = jnp.where(is_g, 1.0, 0.5).astype(jnp.float32)
    a_vec = jnp.where(is_g, 0.0, 0.5).astype(jnp.float32)

    # ---- hoisted, pre-broadcast length masks (none built inside the loop) ----
    out_mask_f = [jnp.broadcast_to((lengths > t).astype(jnp.float32), (BP, G))
                  for t in range(T)]                          # fwd output mask at time t
    state_mask = [jnp.where(lane < G, 1.0,
                            jnp.broadcast_to((lengths > (T - 1 - s)).astype(jnp.float32),
                                             (BP, W)))
                  for s in range(T)]                          # fwd half 1, bwd half len-mask

    whh = whh_ref[...]        # (W, W); nonzero rows only at the two f-blocks (h lanes)

    h = jnp.zeros((BP, W), jnp.float32)
    c = jnp.zeros((BP, W), jnp.float32)

    # ---- fused, fully-unrolled fwd+bwd recurrence: 1 matmul + 1 tanh / step ---
    for s in range(T):
        tf = s
        tb = T - 1 - s
        # precomputed (embedding @ W_ih + b) rows: fwd half at time tf, bwd half
        # at time tb; 128-lane halves -> vreg-aligned concat.
        gx = jnp.concatenate([gall_ref[tf, :, 0:G], gall_ref[tb, :, G:W]], axis=-1)
        gates = gx + jnp.dot(h, whh, preferred_element_type=jnp.float32)   # (BP, W)
        act = a_vec + s_vec * jnp.tanh(s_vec * gates)
        # bring i, g, o onto the f-block lanes ([3H,4H) per direction); only those
        # lanes of h/c are meaningful — all other lanes carry bounded garbage that
        # is killed by the zero rows of whh_pad / wlin_pad.
        c = act * c + _lane_roll(act, 3 * H) * _lane_roll(act, 2 * H)      # f*c + i*g
        h_raw = _lane_roll(act, H) * jnp.tanh(c)                           # o*tanh(c)

        # forward output (zeroed for t >= len) -> fwd half of feats row-block tf
        feats_ref[tf * BP:(tf + 1) * BP, 0:G] = h_raw[:, 0:G] * out_mask_f[tf]

        # backward state held at zero while t >= len (packed-sequence semantics)
        sm = state_mask[s]
        h = h_raw * sm
        c = c * sm
        # backward output for time tb -> bwd half of feats row-block tb
        feats_ref[tb * BP:(tb + 1) * BP, G:W] = h[:, G:W]

    # ---- single output linear over the aligned (T*BP, 2*4H) feats slab --------
    logits = (jnp.dot(feats_ref[...], wlin_ref[...],
                      preferred_element_type=jnp.float32) + blin_ref[...])   # (T*BP, KP)

    # ---- log_softmax over the TIME axis (PyTorch dim=1), aligned row blocks ---
    lg = [logits[t * BP:(t + 1) * BP, :] for t in range(T)]   # T x (BP, KP)
    m = lg[0]
    for t in range(1, T):
        m = jnp.maximum(m, lg[t])
    ssum = jnp.zeros((BP, KP), jnp.float32)
    for t in range(T):
        ssum = ssum + jnp.exp(lg[t] - m)
    lse = jnp.log(ssum) + m
    for t in range(T):
        out_ref[t] = lg[t] - lse


# ------------------------------ parameters ------------------------------------
def make_params(key):
    ks = jax.random.split(key, 9)
    s = 0.1
    H = HID
    p = {
        "emb":   jax.random.normal(ks[0], (VOCAB, EMB), jnp.float32) * s,
        "wih_f": jax.random.normal(ks[1], (EMB, 4 * H), jnp.float32) * s,
        "whh_f": jax.random.normal(ks[2], (H, 4 * H), jnp.float32) * s,
        "b_f":   jax.random.normal(ks[3], (1, 4 * H), jnp.float32) * s,  # b_ih + b_hh
        "wih_b": jax.random.normal(ks[4], (EMB, 4 * H), jnp.float32) * s,
        "whh_b": jax.random.normal(ks[5], (H, 4 * H), jnp.float32) * s,
        "b_b":   jax.random.normal(ks[6], (1, 4 * H), jnp.float32) * s,
        "wlin":  jax.random.normal(ks[7], (2 * H, NUM_TAGS), jnp.float32) * s,
        "blin":  jax.random.normal(ks[8], (1, NUM_TAGS), jnp.float32) * s,
    }

    def perm(w):   # canonical gate order [i|f|g|o] -> kernel lane order [i|g|o|f]
        i, f, g, o = jnp.split(w, 4, axis=-1)
        return jnp.concatenate([i, g, o, f], axis=-1)

    # fused embedding + input projection: token id -> pre-activation gate rows
    wih_wide = jnp.concatenate([perm(p["wih_f"]), perm(p["wih_b"])], axis=1)   # (E, 8H)
    b_wide = jnp.concatenate([perm(p["b_f"]), perm(p["b_b"])], axis=1)         # (1, 8H)
    p["proj_table"] = p["emb"] @ wih_wide + b_wide                             # (VOCAB, 8H)

    # recurrent weights in wide-h form: only the f-block (h) rows are nonzero
    whh_pad = jnp.zeros((W, W), jnp.float32)
    whh_pad = whh_pad.at[3 * H:4 * H, 0:G].set(perm(p["whh_f"]))
    whh_pad = whh_pad.at[7 * H:8 * H, G:W].set(perm(p["whh_b"]))
    p["whh_pad"] = whh_pad

    # output linear consuming the wide feats slab; tag lanes padded to 128
    wlin_pad = jnp.zeros((W, KP), jnp.float32)
    wlin_pad = wlin_pad.at[3 * H:4 * H, :NUM_TAGS].set(p["wlin"][:H])
    wlin_pad = wlin_pad.at[7 * H:8 * H, :NUM_TAGS].set(p["wlin"][H:])
    p["wlin_pad"] = wlin_pad
    p["blin_pad"] = jnp.zeros((1, KP), jnp.float32).at[:, :NUM_TAGS].set(p["blin"])
    return p


# ------------------------------ wrapper (glue) --------------------------------
@jax.jit
def bilstm_forward(sentence, seq_len, params):
    T, B = MAX_LEN, BATCH
    # token ids -> rows of the precomputed (VOCAB, 8H) projection table
    # (embedding lookup + x @ W_ih + b folded into one gather); batch padded to 8.
    idx = jnp.zeros((T, BP), jnp.int32).at[:, :B].set(sentence.T)
    gall = jnp.take(params["proj_table"], idx, axis=0)                  # (T, BP, 8H)
    lengths = jnp.zeros((BP, 1), jnp.int32).at[:B, 0].set(
        jnp.minimum(seq_len, 192).astype(jnp.int32))                    # clamp(max=192)

    out = pl.pallas_call(
        bilstm_kernel,
        out_shape=jax.ShapeDtypeStruct((T, BP, KP), jnp.float32),
        in_specs=[pl.BlockSpec(memory_space=pltpu.MemorySpace.VMEM)] * 5,
        out_specs=pl.BlockSpec(memory_space=pltpu.MemorySpace.VMEM),
        scratch_shapes=[pltpu.VMEM((T * BP, W), jnp.float32)],
    )(lengths, gall, params["whh_pad"], params["wlin_pad"], params["blin_pad"])

    # (T, BP, KP) -> (B, K, T)  == PyTorch log_softmax(dim=1).permute(0, 2, 1)
    return jnp.transpose(out[:, :B, :NUM_TAGS], (1, 2, 0))


# --------------------------- pure-JAX reference -------------------------------
def reference_forward(sentence, seq_len, params):
    emb = jnp.take(params["emb"], sentence, axis=0)              # (B, T, E)
    B, T, _ = emb.shape
    H = HID
    lengths = jnp.minimum(seq_len, 192).astype(jnp.int32)

    def cell(x_t, h, c, wih, whh, b):
        gates = x_t @ wih + h @ whh + b
        i = jax.nn.sigmoid(gates[:, 0 * H:1 * H])
        f = jax.nn.sigmoid(gates[:, 1 * H:2 * H])
        g = jnp.tanh(gates[:, 2 * H:3 * H])
        o = jax.nn.sigmoid(gates[:, 3 * H:4 * H])
        c = f * c + i * g
        h = o * jnp.tanh(c)
        return h, c

    zeros = jnp.zeros((B, H), jnp.float32)
    h, c = zeros, zeros
    hf = []
    for t in range(T):
        h, c = cell(emb[:, t], h, c, params["wih_f"], params["whh_f"], params["b_f"])
        mask = (lengths > t)[:, None].astype(jnp.float32)
        hf.append(h * mask)
    hf = jnp.stack(hf, axis=1)                                   # (B, T, H)

    h, c = zeros, zeros
    hb = [None] * T
    for t in range(T - 1, -1, -1):
        h, c = cell(emb[:, t], h, c, params["wih_b"], params["whh_b"], params["b_b"])
        mask = (lengths > t)[:, None].astype(jnp.float32)
        h = h * mask
        c = c * mask
        hb[t] = h
    hb = jnp.stack(hb, axis=1)                                   # (B, T, H)

    out = jnp.concatenate([hf, hb], axis=-1)                     # (B, T, 2H)
    logits = out @ params["wlin"] + params["blin"]               # (B, T, K)
    logp = jax.nn.log_softmax(logits, axis=1)                    # over time dim
    return jnp.transpose(logp, (0, 2, 1))                        # (B, K, T)


# ----------------------------------- main -------------------------------------
if __name__ == "__main__":
    key = jax.random.PRNGKey(0)
    kp, kx = jax.random.split(key)
    params = make_params(kp)

    sentence = jax.random.randint(kx, (BATCH, MAX_LEN), 0, VOCAB, dtype=jnp.int32)
    seq_len = jnp.array([MAX_LEN, 5], dtype=jnp.int32)

    out = bilstm_forward(sentence, seq_len, params)
    out = jax.block_until_ready(out)

    assert out.shape == (BATCH, NUM_TAGS, MAX_LEN), out.shape
    ref = reference_forward(sentence, seq_len, params)
    np.testing.assert_allclose(np.asarray(out), np.asarray(ref), rtol=2e-3, atol=2e-3)

    print("KERNEL_OK")
</pallas_src>

<mosaic_0001>
module attributes {stable_mosaic.version = 11 : i64} {
  func.func @bilstm_kernel(%arg0: memref<8x1xi32, #tpu.memory_space<vmem>>, %arg1: memref<8x8x256xf32, #tpu.memory_space<vmem>>, %arg2: memref<256x256xf32, #tpu.memory_space<vmem>>, %arg3: memref<256x128xf32, #tpu.memory_space<vmem>>, %arg4: memref<1x128xf32, #tpu.memory_space<vmem>>, %arg5: memref<8x8x128xf32, #tpu.memory_space<vmem>>, %arg6: memref<64x256xf32, #tpu.memory_space<vmem>>) attributes {dimension_semantics = [], scalar_prefetch = 0 : i64, scratch_operands = 1 : i64, tpu.core_type = #tpu.core_type<tc>} {
    %c0 = arith.constant 0 : index
    %c0_0 = arith.constant 0 : index
    %0 = vector.load %arg0[%c0, %c0_0] : memref<8x1xi32, #tpu.memory_space<vmem>>, vector<8x1xi32>
    %1 = tpu.iota {dimensions = array<i32: 1>} : vector<8x256xi32>
    %c128_i32 = arith.constant 128 : i32
    %c0_i32 = arith.constant 0 : i32
    %2 = arith.cmpi eq, %c128_i32, %c0_i32 : i32
    %c1_i32 = arith.constant 1 : i32
    %3 = arith.select %2, %c1_i32, %c128_i32 : i32
    %4 = vector.broadcast %3 : i32 to vector<8x256xi32>
    %5 = arith.remsi %1, %4 : vector<8x256xi32>
    %c0_i32_1 = arith.constant 0 : i32
    %6 = vector.broadcast %c0_i32_1 : i32 to vector<8x256xi32>
    %7 = arith.cmpi ne, %5, %6 : vector<8x256xi32>
    %c0_i32_2 = arith.constant 0 : i32
    %8 = vector.broadcast %c0_i32_2 : i32 to vector<8x256xi32>
    %9 = arith.cmpi slt, %5, %8 : vector<8x256xi32>
    %c0_i32_3 = arith.constant 0 : i32
    %10 = arith.cmpi slt, %3, %c0_i32_3 : i32
    %11 = vector.broadcast %10 : i1 to vector<8x256xi1>
    %12 = vector.broadcast %11 : vector<8x256xi1> to vector<8x256xi1>
    %13 = arith.xori %9, %12 : vector<8x256xi1>
    %14 = arith.andi %13, %7 : vector<8x256xi1>
    %15 = vector.broadcast %3 : i32 to vector<8x256xi32>
    %16 = arith.addi %5, %15 : vector<8x256xi32>
    %17 = arith.select %14, %16, %5 : vector<8x256xi1>, vector<8x256xi32>
    %c32_i32 = arith.constant 32 : i32
    %18 = vector.broadcast %c32_i32 : i32 to vector<8x256xi32>
    %19 = arith.cmpi sge, %17, %18 : vector<8x256xi32>
    %c64_i32 = arith.constant 64 : i32
    %20 = vector.broadcast %c64_i32 : i32 to vector<8x256xi32>
    %21 = arith.cmpi slt, %17, %20 : vector<8x256xi32>
    %22 = arith.andi %19, %21 : vector<8x256xi1>
    %cst = arith.constant 1.000000e+00 : f32
    %cst_4 = arith.constant 5.000000e-01 : f32
    %23 = vector.broadcast %cst : f32 to vector<8x256xf32>
    %24 = vector.broadcast %cst_4 : f32 to vector<8x256xf32>
    %25 = arith.select %22, %23, %24 : vector<8x256xi1>, vector<8x256xf32>
    %cst_5 = arith.constant 0.000000e+00 : f32
    %cst_6 = arith.constant 5.000000e-01 : f32
    %26 = vector.broadcast %cst_5 : f32 to vector<8x256xf32>
    %27 = vector.broadcast %cst_6 : f32 to vector<8x256xf32>
    %28 = arith.select %22, %26, %27 : vector<8x256xi1>, vector<8x256xf32>
    %c0_i32_7 = arith.constant 0 : i32
    %29 = vector.broadcast %c0_i32_7 : i32 to vector<8x1xi32>
    %30 = arith.cmpi sgt, %0, %29 : vector<8x1xi32>
    %31 = arith.extui %30 : vector<8x1xi1> to vector<8x1xi32>
    %32 = arith.sitofp %31 : vector<8x1xi32> to vector<8x1xf32>
    %33 = vector.shape_cast %32 : vector<8x1xf32> to vector<8x1xf32>
    %34 = vector.broadcast %33 : vector<8x1xf32> to vector<8x128xf32>
    %c1_i32_8 = arith.constant 1 : i32
    %35 = vector.broadcast %c1_i32_8 : i32 to vector<8x1xi32>
    %36 = arith.cmpi sgt, %0, %35 : vector<8x1xi32>
    %37 = arith.extui %36 : vector<8x1xi1> to vector<8x1xi32>
    %38 = arith.sitofp %37 : vector<8x1xi32> to vector<8x1xf32>
    %39 = vector.shape_cast %38 : vector<8x1xf32> to vector<8x1xf32>
    %40 = vector.broadcast %39 : vector<8x1xf32> to vector<8x128xf32>
    %c2_i32 = arith.constant 2 : i32
    %41 = vector.broadcast %c2_i32 : i32 to vector<8x1xi32>
    %42 = arith.cmpi sgt, %0, %41 : vector<8x1xi32>
    %43 = arith.extui %42 : vector<8x1xi1> to vector<8x1xi32>
    %44 = arith.sitofp %43 : vector<8x1xi32> to vector<8x1xf32>
    %45 = vector.shape_cast %44 : vector<8x1xf32> to vector<8x1xf32>
    %46 = vector.broadcast %45 : vector<8x1xf32> to vector<8x128xf32>
    %c3_i32 = arith.constant 3 : i32
    %47 = vector.broadcast %c3_i32 : i32 to vector<8x1xi32>
    %48 = arith.cmpi sgt, %0, %47 : vector<8x1xi32>
    %49 = arith.extui %48 : vector<8x1xi1> to vector<8x1xi32>
    %50 = arith.sitofp %49 : vector<8x1xi32> to vector<8x1xf32>
    %51 = vector.shape_cast %50 : vector<8x1xf32> to vector<8x1xf32>
    %52 = vector.broadcast %51 : vector<8x1xf32> to vector<8x128xf32>
    %c4_i32 = arith.constant 4 : i32
    %53 = vector.broadcast %c4_i32 : i32 to vector<8x1xi32>
    %54 = arith.cmpi sgt, %0, %53 : vector<8x1xi32>
    %55 = arith.extui %54 : vector<8x1xi1> to vector<8x1xi32>
    %56 = arith.sitofp %55 : vector<8x1xi32> to vector<8x1xf32>
    %57 = vector.shape_cast %56 : vector<8x1xf32> to vector<8x1xf32>
    %58 = vector.broadcast %57 : vector<8x1xf32> to vector<8x128xf32>
    %c5_i32 = arith.constant 5 : i32
    %59 = vector.broadcast %c5_i32 : i32 to vector<8x1xi32>
    %60 = arith.cmpi sgt, %0, %59 : vector<8x1xi32>
    %61 = arith.extui %60 : vector<8x1xi1> to vector<8x1xi32>
    %62 = arith.sitofp %61 : vector<8x1xi32> to vector<8x1xf32>
    %63 = vector.shape_cast %62 : vector<8x1xf32> to vector<8x1xf32>
    %64 = vector.broadcast %63 : vector<8x1xf32> to vector<8x128xf32>
    %c6_i32 = arith.constant 6 : i32
    %65 = vector.broadcast %c6_i32 : i32 to vector<8x1xi32>
    %66 = arith.cmpi sgt, %0, %65 : vector<8x1xi32>
    %67 = arith.extui %66 : vector<8x1xi1> to vector<8x1xi32>
    %68 = arith.sitofp %67 : vector<8x1xi32> to vector<8x1xf32>
    %69 = vector.shape_cast %68 : vector<8x1xf32> to vector<8x1xf32>
    %70 = vector.broadcast %69 : vector<8x1xf32> to vector<8x128xf32>
    %c7_i32 = arith.constant 7 : i32
    %71 = vector.broadcast %c7_i32 : i32 to vector<8x1xi32>
    %72 = arith.cmpi sgt, %0, %71 : vector<8x1xi32>
    %73 = arith.extui %72 : vector<8x1xi1> to vector<8x1xi32>
    %74 = arith.sitofp %73 : vector<8x1xi32> to vector<8x1xf32>
    %75 = vector.shape_cast %74 : vector<8x1xf32> to vector<8x1xf32>
    %76 = vector.broadcast %75 : vector<8x1xf32> to vector<8x128xf32>
    %c128_i32_9 = arith.constant 128 : i32
    %77 = vector.broadcast %c128_i32_9 : i32 to vector<8x256xi32>
    %78 = arith.cmpi slt, %1, %77 : vector<8x256xi32>
    %c7_i32_10 = arith.constant 7 : i32
    %79 = vector.broadcast %c7_i32_10 : i32 to vector<8x1xi32>
    %80 = arith.cmpi sgt, %0, %79 : vector<8x1xi32>
    %81 = arith.extui %80 : vector<8x1xi1> to vector<8x1xi32>
    %82 = arith.sitofp %81 : vector<8x1xi32> to vector<8x1xf32>
    %83 = vector.shape_cast %82 : vector<8x1xf32> to vector<8x1xf32>
    %84 = vector.broadcast %83 : vector<8x1xf32> to vector<8x256xf32>
    %cst_11 = arith.constant 1.000000e+00 : f32
    %85 = vector.broadcast %cst_11 : f32 to vector<8x256xf32>
    %86 = arith.select %78, %85, %84 : vector<8x256xi1>, vector<8x256xf32>
    %c128_i32_12 = arith.constant 128 : i32
    %87 = vector.broadcast %c128_i32_12 : i32 to vector<8x256xi32>
    %88 = arith.cmpi slt, %1, %87 : vector<8x256xi32>
    %c6_i32_13 = arith.constant 6 : i32
    %89 = vector.broadcast %c6_i32_13 : i32 to vector<8x1xi32>
    %90 = arith.cmpi sgt, %0, %89 : vector<8x1xi32>
    %91 = arith.extui %90 : vector<8x1xi1> to vector<8x1xi32>
    %92 = arith.sitofp %91 : vector<8x1xi32> to vector<8x1xf32>
    %93 = vector.shape_cast %92 : vector<8x1xf32> to vector<8x1xf32>
    %94 = vector.broadcast %93 : vector<8x1xf32> to vector<8x256xf32>
    %cst_14 = arith.constant 1.000000e+00 : f32
    %95 = vector.broadcast %cst_14 : f32 to vector<8x256xf32>
    %96 = arith.select %88, %95, %94 : vector<8x256xi1>, vector<8x256xf32>
    %c128_i32_15 = arith.constant 128 : i32
    %97 = vector.broadcast %c128_i32_15 : i32 to vector<8x256xi32>
    %98 = arith.cmpi slt, %1, %97 : vector<8x256xi32>
    %c5_i32_16 = arith.constant 5 : i32
    %99 = vector.broadcast %c5_i32_16 : i32 to vector<8x1xi32>
    %100 = arith.cmpi sgt, %0, %99 : vector<8x1xi32>
    %101 = arith.extui %100 : vector<8x1xi1> to vector<8x1xi32>
    %102 = arith.sitofp %101 : vector<8x1xi32> to vector<8x1xf32>
    %103 = vector.shape_cast %102 : vector<8x1xf32> to vector<8x1xf32>
    %104 = vector.broadcast %103 : vector<8x1xf32> to vector<8x256xf32>
    %cst_17 = arith.constant 1.000000e+00 : f32
    %105 = vector.broadcast %cst_17 : f32 to vector<8x256xf32>
    %106 = arith.select %98, %105, %104 : vector<8x256xi1>, vector<8x256xf32>
    %c128_i32_18 = arith.constant 128 : i32
    %107 = vector.broadcast %c128_i32_18 : i32 to vector<8x256xi32>
    %108 = arith.cmpi slt, %1, %107 : vector<8x256xi32>
    %c4_i32_19 = arith.constant 4 : i32
    %109 = vector.broadcast %c4_i32_19 : i32 to vector<8x1xi32>
    %110 = arith.cmpi sgt, %0, %109 : vector<8x1xi32>
    %111 = arith.extui %110 : vector<8x1xi1> to vector<8x1xi32>
    %112 = arith.sitofp %111 : vector<8x1xi32> to vector<8x1xf32>
    %113 = vector.shape_cast %112 : vector<8x1xf32> to vector<8x1xf32>
    %114 = vector.broadcast %113 : vector<8x1xf32> to vector<8x256xf32>
    %cst_20 = arith.constant 1.000000e+00 : f32
    %115 = vector.broadcast %cst_20 : f32 to vector<8x256xf32>
    %116 = arith.select %108, %115, %114 : vector<8x256xi1>, vector<8x256xf32>
    %c128_i32_21 = arith.constant 128 : i32
    %117 = vector.broadcast %c128_i32_21 : i32 to vector<8x256xi32>
    %118 = arith.cmpi slt, %1, %117 : vector<8x256xi32>
    %c3_i32_22 = arith.constant 3 : i32
    %119 = vector.broadcast %c3_i32_22 : i32 to vector<8x1xi32>
    %120 = arith.cmpi sgt, %0, %119 : vector<8x1xi32>
    %121 = arith.extui %120 : vector<8x1xi1> to vector<8x1xi32>
    %122 = arith.sitofp %121 : vector<8x1xi32> to vector<8x1xf32>
    %123 = vector.shape_cast %122 : vector<8x1xf32> to vector<8x1xf32>
    %124 = vector.broadcast %123 : vector<8x1xf32> to vector<8x256xf32>
    %cst_23 = arith.constant 1.000000e+00 : f32
    %125 = vector.broadcast %cst_23 : f32 to vector<8x256xf32>
    %126 = arith.select %118, %125, %124 : vector<8x256xi1>, vector<8x256xf32>
    %c128_i32_24 = arith.constant 128 : i32
    %127 = vector.broadcast %c128_i32_24 : i32 to vector<8x256xi32>
    %128 = arith.cmpi slt, %1, %127 : vector<8x256xi32>
    %c2_i32_25 = arith.constant 2 : i32
    %129 = vector.broadcast %c2_i32_25 : i32 to vector<8x1xi32>
    %130 = arith.cmpi sgt, %0, %129 : vector<8x1xi32>
    %131 = arith.extui %130 : vector<8x1xi1> to vector<8x1xi32>
    %132 = arith.sitofp %131 : vector<8x1xi32> to vector<8x1xf32>
    %133 = vector.shape_cast %132 : vector<8x1xf32> to vector<8x1xf32>
    %134 = vector.broadcast %133 : vector<8x1xf32> to vector<8x256xf32>
    %cst_26 = arith.constant 1.000000e+00 : f32
    %135 = vector.broadcast %cst_26 : f32 to vector<8x256xf32>
    %136 = arith.select %128, %135, %134 : vector<8x256xi1>, vector<8x256xf32>
    %c128_i32_27 = arith.constant 128 : i32
    %137 = vector.broadcast %c128_i32_27 : i32 to vector<8x256xi32>
    %138 = arith.cmpi slt, %1, %137 : vector<8x256xi32>
    %c1_i32_28 = arith.constant 1 : i32
    %139 = vector.broadcast %c1_i32_28 : i32 to vector<8x1xi32>
    %140 = arith.cmpi sgt, %0, %139 : vector<8x1xi32>
    %141 = arith.extui %140 : vector<8x1xi1> to vector<8x1xi32>
    %142 = arith.sitofp %141 : vector<8x1xi32> to vector<8x1xf32>
    %143 = vector.shape_cast %142 : vector<8x1xf32> to vector<8x1xf32>
    %144 = vector.broadcast %143 : vector<8x1xf32> to vector<8x256xf32>
    %cst_29 = arith.constant 1.000000e+00 : f32
    %145 = vector.broadcast %cst_29 : f32 to vector<8x256xf32>
    %146 = arith.select %138, %145, %144 : vector<8x256xi1>, vector<8x256xf32>
    %c128_i32_30 = arith.constant 128 : i32
    %147 = vector.broadcast %c128_i32_30 : i32 to vector<8x256xi32>
    %148 = arith.cmpi slt, %1, %147 : vector<8x256xi32>
    %c0_i32_31 = arith.constant 0 : i32
    %149 = vector.broadcast %c0_i32_31 : i32 to vector<8x1xi32>
    %150 = arith.cmpi sgt, %0, %149 : vector<8x1xi32>
    %151 = arith.extui %150 : vector<8x1xi1> to vector<8x1xi32>
    %152 = arith.sitofp %151 : vector<8x1xi32> to vector<8x1xf32>
    %153 = vector.shape_cast %152 : vector<8x1xf32> to vector<8x1xf32>
    %154 = vector.broadcast %153 : vector<8x1xf32> to vector<8x256xf32>
    %cst_32 = arith.constant 1.000000e+00 : f32
    %155 = vector.broadcast %cst_32 : f32 to vector<8x256xf32>
    %156 = arith.select %148, %155, %154 : vector<8x256xi1>, vector<8x256xf32>
    %c0_33 = arith.constant 0 : index
    %c0_34 = arith.constant 0 : index
    %157 = vector.load %arg2[%c0_33, %c0_34] : memref<256x256xf32, #tpu.memory_space<vmem>>, vector<256x256xf32>
    %cst_35 = arith.constant 0.000000e+00 : f32
    %158 = vector.broadcast %cst_35 : f32 to vector<8x256xf32>
    %cst_36 = arith.constant 0.000000e+00 : f32
    %159 = vector.broadcast %cst_36 : f32 to vector<8x256xf32>
    %c0_37 = arith.constant 0 : index
    %c0_38 = arith.constant 0 : index
    %c0_39 = arith.constant 0 : index
    %160 = vector.load %arg1[%c0_37, %c0_38, %c0_39] : memref<8x8x256xf32, #tpu.memory_space<vmem>>, vector<1x8x128xf32>
    %161 = vector.shape_cast %160 : vector<1x8x128xf32> to vector<8x128xf32>
    %c7 = arith.constant 7 : index
    %c0_40 = arith.constant 0 : index
    %c128 = arith.constant 128 : index
    %162 = vector.load %arg1[%c7, %c0_40, %c128] : memref<8x8x256xf32, #tpu.memory_space<vmem>>, vector<1x8x128xf32>
    %163 = vector.shape_cast %162 : vector<1x8x128xf32> to vector<8x128xf32>
    %164 = tpu.concatenate %161, %163 in 1 : vector<8x128xf32>, vector<8x128xf32> -> vector<8x256xf32>
    %cst_41 = arith.constant dense<0.000000e+00> : vector<8x256xf32>
    %165 = tpu.matmul %158, %157, %cst_41 {dimension_numbers = #tpu.dot_dimension_numbers<[1], [0], [0], [1], [0, 0, 1, 1], [], []>} : vector<8x256xf32>, vector<256x256xf32>, vector<8x256xf32> -> vector<8x256xf32>
    %166 = arith.addf %164, %165 : vector<8x256xf32>
    %167 = arith.mulf %25, %166 : vector<8x256xf32>
    %168 = math.tanh %167 : vector<8x256xf32>
    %169 = arith.mulf %25, %168 : vector<8x256xf32>
    %170 = arith.addf %28, %169 : vector<8x256xf32>
    %171 = arith.mulf %170, %159 : vector<8x256xf32>
    %172 = vector.extract_strided_slice %170 {offsets = [0, 160], sizes = [8, 96], strides = [1, 1]} : vector<8x256xf32> to vector<8x96xf32>
    %173 = vector.extract_strided_slice %170 {offsets = [0, 0], sizes = [8, 160], strides = [1, 1]} : vector<8x256xf32> to vector<8x160xf32>
    %174 = tpu.concatenate %172, %173 in 1 : vector<8x96xf32>, vector<8x160xf32> -> vector<8x256xf32>
    %175 = vector.extract_strided_slice %170 {offsets = [0, 192], sizes = [8, 64], strides = [1, 1]} : vector<8x256xf32> to vector<8x64xf32>
    %176 = vector.extract_strided_slice %170 {offsets = [0, 0], sizes = [8, 192], strides = [1, 1]} : vector<8x256xf32> to vector<8x192xf32>
    %177 = tpu.concatenate %175, %176 in 1 : vector<8x64xf32>, vector<8x192xf32> -> vector<8x256xf32>
    %178 = arith.mulf %174, %177 : vector<8x256xf32>
    %179 = arith.addf %171, %178 : vector<8x256xf32>
    %180 = vector.extract_strided_slice %170 {offsets = [0, 224], sizes = [8, 32], strides = [1, 1]} : vector<8x256xf32> to vector<8x32xf32>
    %181 = vector.extract_strided_slice %170 {offsets = [0, 0], sizes = [8, 224], strides = [1, 1]} : vector<8x256xf32> to vector<8x224xf32>
    %182 = tpu.concatenate %180, %181 in 1 : vector<8x32xf32>, vector<8x224xf32> -> vector<8x256xf32>
    %183 = math.tanh %179 : vector<8x256xf32>
    %184 = arith.mulf %182, %183 : vector<8x256xf32>
    %185 = vector.extract_strided_slice %184 {offsets = [0, 0], sizes = [8, 128], strides = [1, 1]} : vector<8x256xf32> to vector<8x128xf32>
    %186 = arith.mulf %185, %34 : vector<8x128xf32>
    %c0_42 = arith.constant 0 : index
    %c0_43 = arith.constant 0 : index
    %187 = vector.load %arg6[%c0_42, %c0_43] : memref<64x256xf32, #tpu.memory_space<vmem>>, vector<8x128xf32>
    tpu.vector_store %arg6[%c0_42, %c0_43], %186 {strides = array<i32>} : memref<64x256xf32, #tpu.memory_space<vmem>>, vector<8x128xf32>,
    %188 = arith.mulf %184, %86 : vector<8x256xf32>
    %189 = arith.mulf %179, %86 : vector<8x256xf32>
    %190 = vector.extract_strided_slice %188 {offsets = [0, 128], sizes = [8, 128], strides = [1, 1]} : vector<8x256xf32> to vector<8x128xf32>
    %c56 = arith.constant 56 : index
    %c128_44 = arith.constant 128 : index
    %191 = vector.load %arg6[%c56, %c128_44] : memref<64x256xf32, #tpu.memory_space<vmem>>, vector<8x128xf32>
    tpu.vector_store %arg6[%c56, %c128_44], %190 {strides = array<i32>} : memref<64x256xf32, #tpu.memory_space<vmem>>, vector<8x128xf32>,
    %c1 = arith.constant 1 : index
    %c0_45 = arith.constant 0 : index
    %c0_46 = arith.constant 0 : index
    %192 = vector.load %arg1[%c1, %c0_45, %c0_46] : memref<8x8x256xf32, #tpu.memory_space<vmem>>, vector<1x8x128xf32>
    %193 = vector.shape_cast %192 : vector<1x8x128xf32> to vector<8x128xf32>
    %c6 = arith.constant 6 : index
    %c0_47 = arith.constant 0 : index
    %c128_48 = arith.constant 128 : index
    %194 = vector.load %arg1[%c6, %c0_47, %c128_48] : memref<8x8x256xf32, #tpu.memory_space<vmem>>, vector<1x8x128xf32>
    %195 = vector.shape_cast %194 : vector<1x8x128xf32> to vector<8x128xf32>
    %196 = tpu.concatenate %193, %195 in 1 : vector<8x128xf32>, vector<8x128xf32> -> vector<8x256xf32>
    %cst_49 = arith.constant dense<0.000000e+00> : vector<8x256xf32>
    %197 = tpu.matmul %188, %157, %cst_49 {dimension_numbers = #tpu.dot_dimension_numbers<[1], [0], [0], [1], [0, 0, 1, 1], [], []>} : vector<8x256xf32>, vector<256x256xf32>, vector<8x256xf32> -> vector<8x256xf32>
    %198 = arith.addf %196, %197 : vector<8x256xf32>
    %199 = arith.mulf %25, %198 : vector<8x256xf32>
    %200 = math.tanh %199 : vector<8x256xf32>
    %201 = arith.mulf %25, %200 : vector<8x256xf32>
    %202 = arith.addf %28, %201 : vector<8x256xf32>
    %203 = arith.mulf %202, %189 : vector<8x256xf32>
    %204 = vector.extract_strided_slice %202 {offsets = [0, 160], sizes = [8, 96], strides = [1, 1]} : vector<8x256xf32> to vector<8x96xf32>
    %205 = vector.extract_strided_slice %202 {offsets = [0, 0], sizes = [8, 160], strides = [1, 1]} : vector<8x256xf32> to vector<8x160xf32>
    %206 = tpu.concatenate %204, %205 in 1 : vector<8x96xf32>, vector<8x160xf32> -> vector<8x256xf32>
    %207 = vector.extract_strided_slice %202 {offsets = [0, 192], sizes = [8, 64], strides = [1, 1]} : vector<8x256xf32> to vector<8x64xf32>
    %208 = vector.extract_strided_slice %202 {offsets = [0, 0], sizes = [8, 192], strides = [1, 1]} : vector<8x256xf32> to vector<8x192xf32>
    %209 = tpu.concatenate %207, %208 in 1 : vector<8x64xf32>, vector<8x192xf32> -> vector<8x256xf32>
    %210 = arith.mulf %206, %209 : vector<8x256xf32>
    %211 = arith.addf %203, %210 : vector<8x256xf32>
    %212 = vector.extract_strided_slice %202 {offsets = [0, 224], sizes = [8, 32], strides = [1, 1]} : vector<8x256xf32> to vector<8x32xf32>
    %213 = vector.extract_strided_slice %202 {offsets = [0, 0], sizes = [8, 224], strides = [1, 1]} : vector<8x256xf32> to vector<8x224xf32>
    %214 = tpu.concatenate %212, %213 in 1 : vector<8x32xf32>, vector<8x224xf32> -> vector<8x256xf32>
    %215 = math.tanh %211 : vector<8x256xf32>
    %216 = arith.mulf %214, %215 : vector<8x256xf32>
    %217 = vector.extract_strided_slice %216 {offsets = [0, 0], sizes = [8, 128], strides = [1, 1]} : vector<8x256xf32> to vector<8x128xf32>
    %218 = arith.mulf %217, %40 : vector<8x128xf32>
    %c8 = arith.constant 8 : index
    %c0_50 = arith.constant 0 : index
    %219 = vector.load %arg6[%c8, %c0_50] : memref<64x256xf32, #tpu.memory_space<vmem>>, vector<8x128xf32>
    tpu.vector_store %arg6[%c8, %c0_50], %218 {strides = array<i32>} : memref<64x256xf32, #tpu.memory_space<vmem>>, vector<8x128xf32>,
    %220 = arith.mulf %216, %96 : vector<8x256xf32>
    %221 = arith.mulf %211, %96 : vector<8x256xf32>
    %222 = vector.extract_strided_slice %220 {offsets = [0, 128], sizes = [8, 128], strides = [1, 1]} : vector<8x256xf32> to vector<8x128xf32>
    %c48 = arith.constant 48 : index
    %c128_51 = arith.constant 128 : index
    %223 = vector.load %arg6[%c48, %c128_51] : memref<64x256xf32, #tpu.memory_space<vmem>>, vector<8x128xf32>
    tpu.vector_store %arg6[%c48, %c128_51], %222 {strides = array<i32>} : memref<64x256xf32, #tpu.memory_space<vmem>>, vector<8x128xf32>,
    %c2 = arith.constant 2 : index
    %c0_52 = arith.constant 0 : index
    %c0_53 = arith.constant 0 : index
    %224 = vector.load %arg1[%c2, %c0_52, %c0_53] : memref<8x8x256xf32, #tpu.memory_space<vmem>>, vector<1x8x128xf32>
    %225 = vector.shape_cast %224 : vector<1x8x128xf32> to vector<8x128xf32>
    %c5 = arith.constant 5 : index
    %c0_54 = arith.constant 0 : index
    %c128_55 = arith.constant 128 : index
    %226 = vector.load %arg1[%c5, %c0_54, %c128_55] : memref<8x8x256xf32, #tpu.memory_space<vmem>>, vector<1x8x128xf32>
    %227 = vector.shape_cast %226 : vector<1x8x128xf32> to vector<8x128xf32>
    %228 = tpu.concatenate %225, %227 in 1 : vector<8x128xf32>, vector<8x128xf32> -> vector<8x256xf32>
    %cst_56 = arith.constant dense<0.000000e+00> : vector<8x256xf32>
    %229 = tpu.matmul %220, %157, %cst_56 {dimension_numbers = #tpu.dot_dimension_numbers<[1], [0], [0], [1], [0, 0, 1, 1], [], []>} : vector<8x256xf32>, vector<256x256xf32>, vector<8x256xf32> -> vector<8x256xf32>
    %230 = arith.addf %228, %229 : vector<8x256xf32>
    %231 = arith.mulf %25, %230 : vector<8x256xf32>
    %232 = math.tanh %231 : vector<8x256xf32>
    %233 = arith.mulf %25, %232 : vector<8x256xf32>
    %234 = arith.addf %28, %233 : vector<8x256xf32>
    %235 = arith.mulf %234, %221 : vector<8x256xf32>
    %236 = vector.extract_strided_slice %234 {offsets = [0, 160], sizes = [8, 96], strides = [1, 1]} : vector<8x256xf32> to vector<8x96xf32>
    %237 = vector.extract_strided_slice %234 {offsets = [0, 0], sizes = [8, 160], strides = [1, 1]} : vector<8x256xf32> to vector<8x160xf32>
    %238 = tpu.concatenate %236, %237 in 1 : vector<8x96xf32>, vector<8x160xf32> -> vector<8x256xf32>
    %239 = vector.extract_strided_slice %234 {offsets = [0, 192], sizes = [8, 64], strides = [1, 1]} : vector<8x256xf32> to vector<8x64xf32>
    %240 = vector.extract_strided_slice %234 {offsets = [0, 0], sizes = [8, 192], strides = [1, 1]} : vector<8x256xf32> to vector<8x192xf32>
    %241 = tpu.concatenate %239, %240 in 1 : vector<8x64xf32>, vector<8x192xf32> -> vector<8x256xf32>
    %242 = arith.mulf %238, %241 : vector<8x256xf32>
    %243 = arith.addf %235, %242 : vector<8x256xf32>
    %244 = vector.extract_strided_slice %234 {offsets = [0, 224], sizes = [8, 32], strides = [1, 1]} : vector<8x256xf32> to vector<8x32xf32>
    %245 = vector.extract_strided_slice %234 {offsets = [0, 0], sizes = [8, 224], strides = [1, 1]} : vector<8x256xf32> to vector<8x224xf32>
    %246 = tpu.concatenate %244, %245 in 1 : vector<8x32xf32>, vector<8x224xf32> -> vector<8x256xf32>
    %247 = math.tanh %243 : vector<8x256xf32>
    %248 = arith.mulf %246, %247 : vector<8x256xf32>
    %249 = vector.extract_strided_slice %248 {offsets = [0, 0], sizes = [8, 128], strides = [1, 1]} : vector<8x256xf32> to vector<8x128xf32>
    %250 = arith.mulf %249, %46 : vector<8x128xf32>
    %c16 = arith.constant 16 : index
    %c0_57 = arith.constant 0 : index
    %251 = vector.load %arg6[%c16, %c0_57] : memref<64x256xf32, #tpu.memory_space<vmem>>, vector<8x128xf32>
    tpu.vector_store %arg6[%c16, %c0_57], %250 {strides = array<i32>} : memref<64x256xf32, #tpu.memory_space<vmem>>, vector<8x128xf32>,
    %252 = arith.mulf %248, %106 : vector<8x256xf32>
    %253 = arith.mulf %243, %106 : vector<8x256xf32>
    %254 = vector.extract_strided_slice %252 {offsets = [0, 128], sizes = [8, 128], strides = [1, 1]} : vector<8x256xf32> to vector<8x128xf32>
    %c40 = arith.constant 40 : index
    %c128_58 = arith.constant 128 : index
    %255 = vector.load %arg6[%c40, %c128_58] : memref<64x256xf32, #tpu.memory_space<vmem>>, vector<8x128xf32>
    tpu.vector_store %arg6[%c40, %c128_58], %254 {strides = array<i32>} : memref<64x256xf32, #tpu.memory_space<vmem>>, vector<8x128xf32>,
    %c3 = arith.constant 3 : index
    %c0_59 = arith.constant 0 : index
    %c0_60 = arith.constant 0 : index
    %256 = vector.load %arg1[%c3, %c0_59, %c0_60] : memref<8x8x256xf32, #tpu.memory_space<vmem>>, vector<1x8x128xf32>
    %257 = vector.shape_cast %256 : vector<1x8x128xf32> to vector<8x128xf32>
    %c4 = arith.constant 4 : index
    %c0_61 = arith.constant 0 : index
    %c128_62 = arith.constant 128 : index
    %258 = vector.load %arg1[%c4, %c0_61, %c128_62] : memref<8x8x256xf32, #tpu.memory_space<vmem>>, vector<1x8x128xf32>
    %259 = vector.shape_cast %258 : vector<1x8x128xf32> to vector<8x128xf32>
    %260 = tpu.concatenate %257, %259 in 1 : vector<8x128xf32>, vector<8x128xf32> -> vector<8x256xf32>
    %cst_63 = arith.constant dense<0.000000e+00> : vector<8x256xf32>
    %261 = tpu.matmul %252, %157, %cst_63 {dimension_numbers = #tpu.dot_dimension_numbers<[1], [0], [0], [1], [0, 0, 1, 1], [], []>} : vector<8x256xf32>, vector<256x256xf32>, vector<8x256xf32> -> vector<8x256xf32>
    %262 = arith.addf %260, %261 : vector<8x256xf32>
    %263 = arith.mulf %25, %262 : vector<8x256xf32>
    %264 = math.tanh %263 : vector<8x256xf32>
    %265 = arith.mulf %25, %264 : vector<8x256xf32>
    %266 = arith.addf %28, %265 : vector<8x256xf32>
    %267 = arith.mulf %266, %253 : vector<8x256xf32>
    %268 = vector.extract_strided_slice %266 {offsets = [0, 160], sizes = [8, 96], strides = [1, 1]} : vector<8x256xf32> to vector<8x96xf32>
    %269 = vector.extract_strided_slice %266 {offsets = [0, 0], sizes = [8, 160], strides = [1, 1]} : vector<8x256xf32> to vector<8x160xf32>
    %270 = tpu.concatenate %268, %269 in 1 : vector<8x96xf32>, vector<8x160xf32> -> vector<8x256xf32>
    %271 = vector.extract_strided_slice %266 {offsets = [0, 192], sizes = [8, 64], strides = [1, 1]} : vector<8x256xf32> to vector<8x64xf32>
    %272 = vector.extract_strided_slice %266 {offsets = [0, 0], sizes = [8, 192], strides = [1, 1]} : vector<8x256xf32> to vector<8x192xf32>
    %273 = tpu.concatenate %271, %272 in 1 : vector<8x64xf32>, vector<8x192xf32> -> vector<8x256xf32>
    %274 = arith.mulf %270, %273 : vector<8x256xf32>
    %275 = arith.addf %267, %274 : vector<8x256xf32>
    %276 = vector.extract_strided_slice %266 {offsets = [0, 224], sizes = [8, 32], strides = [1, 1]} : vector<8x256xf32> to vector<8x32xf32>
    %277 = vector.extract_strided_slice %266 {offsets = [0, 0], sizes = [8, 224], strides = [1, 1]} : vector<8x256xf32> to vector<8x224xf32>
    %278 = tpu.concatenate %276, %277 in 1 : vector<8x32xf32>, vector<8x224xf32> -> vector<8x256xf32>
    %279 = math.tanh %275 : vector<8x256xf32>
    %280 = arith.mulf %278, %279 : vector<8x256xf32>
    %281 = vector.extract_strided_slice %280 {offsets = [0, 0], sizes = [8, 128], strides = [1, 1]} : vector<8x256xf32> to vector<8x128xf32>
    %282 = arith.mulf %281, %52 : vector<8x128xf32>
    %c24 = arith.constant 24 : index
    %c0_64 = arith.constant 0 : index
    %283 = vector.load %arg6[%c24, %c0_64] : memref<64x256xf32, #tpu.memory_space<vmem>>, vector<8x128xf32>
    tpu.vector_store %arg6[%c24, %c0_64], %282 {strides = array<i32>} : memref<64x256xf32, #tpu.memory_space<vmem>>, vector<8x128xf32>,
    %284 = arith.mulf %280, %116 : vector<8x256xf32>
    %285 = arith.mulf %275, %116 : vector<8x256xf32>
    %286 = vector.extract_strided_slice %284 {offsets = [0, 128], sizes = [8, 128], strides = [1, 1]} : vector<8x256xf32> to vector<8x128xf32>
    %c32 = arith.constant 32 : index
    %c128_65 = arith.constant 128 : index
    %287 = vector.load %arg6[%c32, %c128_65] : memref<64x256xf32, #tpu.memory_space<vmem>>, vector<8x128xf32>
    tpu.vector_store %arg6[%c32, %c128_65], %286 {strides = array<i32>} : memref<64x256xf32, #tpu.memory_space<vmem>>, vector<8x128xf32>,
    %c4_66 = arith.constant 4 : index
    %c0_67 = arith.constant 0 : index
    %c0_68 = arith.constant 0 : index
    %288 = vector.load %arg1[%c4_66, %c0_67, %c0_68] : memref<8x8x256xf32, #tpu.memory_space<vmem>>, vector<1x8x128xf32>
    %289 = vector.shape_cast %288 : vector<1x8x128xf32> to vector<8x128xf32>
    %c3_69 = arith.constant 3 : index
    %c0_70 = arith.constant 0 : index
    %c128_71 = arith.constant 128 : index
    %290 = vector.load %arg1[%c3_69, %c0_70, %c128_71] : memref<8x8x256xf32, #tpu.memory_space<vmem>>, vector<1x8x128xf32>
    %291 = vector.shape_cast %290 : vector<1x8x128xf32> to vector<8x128xf32>
    %292 = tpu.concatenate %289, %291 in 1 : vector<8x128xf32>, vector<8x128xf32> -> vector<8x256xf32>
    %cst_72 = arith.constant dense<0.000000e+00> : vector<8x256xf32>
    %293 = tpu.matmul %284, %157, %cst_72 {dimension_numbers = #tpu.dot_dimension_numbers<[1], [0], [0], [1], [0, 0, 1, 1], [], []>} : vector<8x256xf32>, vector<256x256xf32>, vector<8x256xf32> -> vector<8x256xf32>
    %294 = arith.addf %292, %293 : vector<8x256xf32>
    %295 = arith.mulf %25, %294 : vector<8x256xf32>
    %296 = math.tanh %295 : vector<8x256xf32>
    %297 = arith.mulf %25, %296 : vector<8x256xf32>
    %298 = arith.addf %28, %297 : vector<8x256xf32>
    %299 = arith.mulf %298, %285 : vector<8x256xf32>
    %300 = vector.extract_strided_slice %298 {offsets = [0, 160], sizes = [8, 96], strides = [1, 1]} : vector<8x256xf32> to vector<8x96xf32>
    %301 = vector.extract_strided_slice %298 {offsets = [0, 0], sizes = [8, 160], strides = [1, 1]} : vector<8x256xf32> to vector<8x160xf32>
    %302 = tpu.concatenate %300, %301 in 1 : vector<8x96xf32>, vector<8x160xf32> -> vector<8x256xf32>
    %303 = vector.extract_strided_slice %298 {offsets = [0, 192], sizes = [8, 64], strides = [1, 1]} : vector<8x256xf32> to vector<8x64xf32>
    %304 = vector.extract_strided_slice %298 {offsets = [0, 0], sizes = [8, 192], strides = [1, 1]} : vector<8x256xf32> to vector<8x192xf32>
    %305 = tpu.concatenate %303, %304 in 1 : vector<8x64xf32>, vector<8x192xf32> -> vector<8x256xf32>
    %306 = arith.mulf %302, %305 : vector<8x256xf32>
    %307 = arith.addf %299, %306 : vector<8x256xf32>
    %308 = vector.extract_strided_slice %298 {offsets = [0, 224], sizes = [8, 32], strides = [1, 1]} : vector<8x256xf32> to vector<8x32xf32>
    %309 = vector.extract_strided_slice %298 {offsets = [0, 0], sizes = [8, 224], strides = [1, 1]} : vector<8x256xf32> to vector<8x224xf32>
    %310 = tpu.concatenate %308, %309 in 1 : vector<8x32xf32>, vector<8x224xf32> -> vector<8x256xf32>
    %311 = math.tanh %307 : vector<8x256xf32>
    %312 = arith.mulf %310, %311 : vector<8x256xf32>
    %313 = vector.extract_strided_slice %312 {offsets = [0, 0], sizes = [8, 128], strides = [1, 1]} : vector<8x256xf32> to vector<8x128xf32>
    %314 = arith.mulf %313, %58 : vector<8x128xf32>
    %c32_73 = arith.constant 32 : index
    %c0_74 = arith.constant 0 : index
    %315 = vector.load %arg6[%c32_73, %c0_74] : memref<64x256xf32, #tpu.memory_space<vmem>>, vector<8x128xf32>
    tpu.vector_store %arg6[%c32_73, %c0_74], %314 {strides = array<i32>} : memref<64x256xf32, #tpu.memory_space<vmem>>, vector<8x128xf32>,
    %316 = arith.mulf %312, %126 : vector<8x256xf32>
    %317 = arith.mulf %307, %126 : vector<8x256xf32>
    %318 = vector.extract_strided_slice %316 {offsets = [0, 128], sizes = [8, 128], strides = [1, 1]} : vector<8x256xf32> to vector<8x128xf32>
    %c24_75 = arith.constant 24 : index
    %c128_76 = arith.constant 128 : index
    %319 = vector.load %arg6[%c24_75, %c128_76] : memref<64x256xf32, #tpu.memory_space<vmem>>, vector<8x128xf32>
    tpu.vector_store %arg6[%c24_75, %c128_76], %318 {strides = array<i32>} : memref<64x256xf32, #tpu.memory_space<vmem>>, vector<8x128xf32>,
    %c5_77 = arith.constant 5 : index
    %c0_78 = arith.constant 0 : index
    %c0_79 = arith.constant 0 : index
    %320 = vector.load %arg1[%c5_77, %c0_78, %c0_79] : memref<8x8x256xf32, #tpu.memory_space<vmem>>, vector<1x8x128xf32>
    %321 = vector.shape_cast %320 : vector<1x8x128xf32> to vector<8x128xf32>
    %c2_80 = arith.constant 2 : index
    %c0_81 = arith.constant 0 : index
    %c128_82 = arith.constant 128 : index
    %322 = vector.load %arg1[%c2_80, %c0_81, %c128_82] : memref<8x8x256xf32, #tpu.memory_space<vmem>>, vector<1x8x128xf32>
    %323 = vector.shape_cast %322 : vector<1x8x128xf32> to vector<8x128xf32>
    %324 = tpu.concatenate %321, %323 in 1 : vector<8x128xf32>, vector<8x128xf32> -> vector<8x256xf32>
    %cst_83 = arith.constant dense<0.000000e+00> : vector<8x256xf32>
    %325 = tpu.matmul %316, %157, %cst_83 {dimension_numbers = #tpu.dot_dimension_numbers<[1], [0], [0], [1], [0, 0, 1, 1], [], []>} : vector<8x256xf32>, vector<256x256xf32>, vector<8x256xf32> -> vector<8x256xf32>
    %326 = arith.addf %324, %325 : vector<8x256xf32>
    %327 = arith.mulf %25, %326 : vector<8x256xf32>
    %328 = math.tanh %327 : vector<8x256xf32>
    %329 = arith.mulf %25, %328 : vector<8x256xf32>
    %330 = arith.addf %28, %329 : vector<8x256xf32>
    %331 = arith.mulf %330, %317 : vector<8x256xf32>
    %332 = vector.extract_strided_slice %330 {offsets = [0, 160], sizes = [8, 96], strides = [1, 1]} : vector<8x256xf32> to vector<8x96xf32>
    %333 = vector.extract_strided_slice %330 {offsets = [0, 0], sizes = [8, 160], strides = [1, 1]} : vector<8x256xf32> to vector<8x160xf32>
    %334 = tpu.concatenate %332, %333 in 1 : vector<8x96xf32>, vector<8x160xf32> -> vector<8x256xf32>
    %335 = vector.extract_strided_slice %330 {offsets = [0, 192], sizes = [8, 64], strides = [1, 1]} : vector<8x256xf32> to vector<8x64xf32>
    %336 = vector.extract_strided_slice %330 {offsets = [0, 0], sizes = [8, 192], strides = [1, 1]} : vector<8x256xf32> to vector<8x192xf32>
    %337 = tpu.concatenate %335, %336 in 1 : vector<8x64xf32>, vector<8x192xf32> -> vector<8x256xf32>
    %338 = arith.mulf %334, %337 : vector<8x256xf32>
    %339 = arith.addf %331, %338 : vector<8x256xf32>
    %340 = vector.extract_strided_slice %330 {offsets = [0, 224], sizes = [8, 32], strides = [1, 1]} : vector<8x256xf32> to vector<8x32xf32>
    %341 = vector.extract_strided_slice %330 {offsets = [0, 0], sizes = [8, 224], strides = [1, 1]} : vector<8x256xf32> to vector<8x224xf32>
    %342 = tpu.concatenate %340, %341 in 1 : vector<8x32xf32>, vector<8x224xf32> -> vector<8x256xf32>
    %343 = math.tanh %339 : vector<8x256xf32>
    %344 = arith.mulf %342, %343 : vector<8x256xf32>
    %345 = vector.extract_strided_slice %344 {offsets = [0, 0], sizes = [8, 128], strides = [1, 1]} : vector<8x256xf32> to vector<8x128xf32>
    %346 = arith.mulf %345, %64 : vector<8x128xf32>
    %c40_84 = arith.constant 40 : index
    %c0_85 = arith.constant 0 : index
    %347 = vector.load %arg6[%c40_84, %c0_85] : memref<64x256xf32, #tpu.memory_space<vmem>>, vector<8x128xf32>
    tpu.vector_store %arg6[%c40_84, %c0_85], %346 {strides = array<i32>} : memref<64x256xf32, #tpu.memory_space<vmem>>, vector<8x128xf32>,
    %348 = arith.mulf %344, %136 : vector<8x256xf32>
    %349 = arith.mulf %339, %136 : vector<8x256xf32>
    %350 = vector.extract_strided_slice %348 {offsets = [0, 128], sizes = [8, 128], strides = [1, 1]} : vector<8x256xf32> to vector<8x128xf32>
    %c16_86 = arith.constant 16 : index
    %c128_87 = arith.constant 128 : index
    %351 = vector.load %arg6[%c16_86, %c128_87] : memref<64x256xf32, #tpu.memory_space<vmem>>, vector<8x128xf32>
    tpu.vector_store %arg6[%c16_86, %c128_87], %350 {strides = array<i32>} : memref<64x256xf32, #tpu.memory_space<vmem>>, vector<8x128xf32>,
    %c6_88 = arith.constant 6 : index
    %c0_89 = arith.constant 0 : index
    %c0_90 = arith.constant 0 : index
    %352 = vector.load %arg1[%c6_88, %c0_89, %c0_90] : memref<8x8x256xf32, #tpu.memory_space<vmem>>, vector<1x8x128xf32>
    %353 = vector.shape_cast %352 : vector<1x8x128xf32> to vector<8x128xf32>
    %c1_91 = arith.constant 1 : index
    %c0_92 = arith.constant 0 : index
    %c128_93 = arith.constant 128 : index
    %354 = vector.load %arg1[%c1_91, %c0_92, %c128_93] : memref<8x8x256xf32, #tpu.memory_space<vmem>>, vector<1x8x128xf32>
    %355 = vector.shape_cast %354 : vector<1x8x128xf32> to vector<8x128xf32>
    %356 = tpu.concatenate %353, %355 in 1 : vector<8x128xf32>, vector<8x128xf32> -> vector<8x256xf32>
    %cst_94 = arith.constant dense<0.000000e+00> : vector<8x256xf32>
    %357 = tpu.matmul %348, %157, %cst_94 {dimension_numbers = #tpu.dot_dimension_numbers<[1], [0], [0], [1], [0, 0, 1, 1], [], []>} : vector<8x256xf32>, vector<256x256xf32>, vector<8x256xf32> -> vector<8x256xf32>
    %358 = arith.addf %356, %357 : vector<8x256xf32>
    %359 = arith.mulf %25, %358 : vector<8x256xf32>
    %360 = math.tanh %359 : vector<8x256xf32>
    %361 = arith.mulf %25, %360 : vector<8x256xf32>
    %362 = arith.addf %28, %361 : vector<8x256xf32>
    %363 = arith.mulf %362, %349 : vector<8x256xf32>
    %364 = vector.extract_strided_slice %362 {offsets = [0, 160], sizes = [8, 96], strides = [1, 1]} : vector<8x256xf32> to vector<8x96xf32>
    %365 = vector.extract_strided_slice %362 {offsets = [0, 0], sizes = [8, 160], strides = [1, 1]} : vector<8x256xf32> to vector<8x160xf32>
    %366 = tpu.concatenate %364, %365 in 1 : vector<8x96xf32>, vector<8x160xf32> -> vector<8x256xf32>
    %367 = vector.extract_strided_slice %362 {offsets = [0, 192], sizes = [8, 64], strides = [1, 1]} : vector<8x256xf32> to vector<8x64xf32>
    %368 = vector.extract_strided_slice %362 {offsets = [0, 0], sizes = [8, 192], strides = [1, 1]} : vector<8x256xf32> to vector<8x192xf32>
    %369 = tpu.concatenate %367, %368 in 1 : vector<8x64xf32>, vector<8x192xf32> -> vector<8x256xf32>
    %370 = arith.mulf %366, %369 : vector<8x256xf32>
    %371 = arith.addf %363, %370 : vector<8x256xf32>
    %372 = vector.extract_strided_slice %362 {offsets = [0, 224], sizes = [8, 32], strides = [1, 1]} : vector<8x256xf32> to vector<8x32xf32>
    %373 = vector.extract_strided_slice %362 {offsets = [0, 0], sizes = [8, 224], strides = [1, 1]} : vector<8x256xf32> to vector<8x224xf32>
    %374 = tpu.concatenate %372, %373 in 1 : vector<8x32xf32>, vector<8x224xf32> -> vector<8x256xf32>
    %375 = math.tanh %371 : vector<8x256xf32>
    %376 = arith.mulf %374, %375 : vector<8x256xf32>
    %377 = vector.extract_strided_slice %376 {offsets = [0, 0], sizes = [8, 128], strides = [1, 1]} : vector<8x256xf32> to vector<8x128xf32>
    %378 = arith.mulf %377, %70 : vector<8x128xf32>
    %c48_95 = arith.constant 48 : index
    %c0_96 = arith.constant 0 : index
    %379 = vector.load %arg6[%c48_95, %c0_96] : memref<64x256xf32, #tpu.memory_space<vmem>>, vector<8x128xf32>
    tpu.vector_store %arg6[%c48_95, %c0_96], %378 {strides = array<i32>} : memref<64x256xf32, #tpu.memory_space<vmem>>, vector<8x128xf32>,
    %380 = arith.mulf %376, %146 : vector<8x256xf32>
    %381 = arith.mulf %371, %146 : vector<8x256xf32>
    %382 = vector.extract_strided_slice %380 {offsets = [0, 128], sizes = [8, 128], strides = [1, 1]} : vector<8x256xf32> to vector<8x128xf32>
    %c8_97 = arith.constant 8 : index
    %c128_98 = arith.constant 128 : index
    %383 = vector.load %arg6[%c8_97, %c128_98] : memref<64x256xf32, #tpu.memory_space<vmem>>, vector<8x128xf32>
    tpu.vector_store %arg6[%c8_97, %c128_98], %382 {strides = array<i32>} : memref<64x256xf32, #tpu.memory_space<vmem>>, vector<8x128xf32>,
    %c7_99 = arith.constant 7 : index
    %c0_100 = arith.constant 0 : index
    %c0_101 = arith.constant 0 : index
    %384 = vector.load %arg1[%c7_99, %c0_100, %c0_101] : memref<8x8x256xf32, #tpu.memory_space<vmem>>, vector<1x8x128xf32>
    %385 = vector.shape_cast %384 : vector<1x8x128xf32> to vector<8x128xf32>
    %c0_102 = arith.constant 0 : index
    %c0_103 = arith.constant 0 : index
    %c128_104 = arith.constant 128 : index
    %386 = vector.load %arg1[%c0_102, %c0_103, %c128_104] : memref<8x8x256xf32, #tpu.memory_space<vmem>>, vector<1x8x128xf32>
    %387 = vector.shape_cast %386 : vector<1x8x128xf32> to vector<8x128xf32>
    %388 = tpu.concatenate %385, %387 in 1 : vector<8x128xf32>, vector<8x128xf32> -> vector<8x256xf32>
    %cst_105 = arith.constant dense<0.000000e+00> : vector<8x256xf32>
    %389 = tpu.matmul %380, %157, %cst_105 {dimension_numbers = #tpu.dot_dimension_numbers<[1], [0], [0], [1], [0, 0, 1, 1], [], []>} : vector<8x256xf32>, vector<256x256xf32>, vector<8x256xf32> -> vector<8x256xf32>
    %390 = arith.addf %388, %389 : vector<8x256xf32>
    %391 = arith.mulf %25, %390 : vector<8x256xf32>
    %392 = math.tanh %391 : vector<8x256xf32>
    %393 = arith.mulf %25, %392 : vector<8x256xf32>
    %394 = arith.addf %28, %393 : vector<8x256xf32>
    %395 = arith.mulf %394, %381 : vector<8x256xf32>
    %396 = vector.extract_strided_slice %394 {offsets = [0, 160], sizes = [8, 96], strides = [1, 1]} : vector<8x256xf32> to vector<8x96xf32>
    %397 = vector.extract_strided_slice %394 {offsets = [0, 0], sizes = [8, 160], strides = [1, 1]} : vector<8x256xf32> to vector<8x160xf32>
    %398 = tpu.concatenate %396, %397 in 1 : vector<8x96xf32>, vector<8x160xf32> -> vector<8x256xf32>
    %399 = vector.extract_strided_slice %394 {offsets = [0, 192], sizes = [8, 64], strides = [1, 1]} : vector<8x256xf32> to vector<8x64xf32>
    %400 = vector.extract_strided_slice %394 {offsets = [0, 0], sizes = [8, 192], strides = [1, 1]} : vector<8x256xf32> to vector<8x192xf32>
    %401 = tpu.concatenate %399, %400 in 1 : vector<8x64xf32>, vector<8x192xf32> -> vector<8x256xf32>
    %402 = arith.mulf %398, %401 : vector<8x256xf32>
    %403 = arith.addf %395, %402 : vector<8x256xf32>
    %404 = vector.extract_strided_slice %394 {offsets = [0, 224], sizes = [8, 32], strides = [1, 1]} : vector<8x256xf32> to vector<8x32xf32>
    %405 = vector.extract_strided_slice %394 {offsets = [0, 0], sizes = [8, 224], strides = [1, 1]} : vector<8x256xf32> to vector<8x224xf32>
    %406 = tpu.concatenate %404, %405 in 1 : vector<8x32xf32>, vector<8x224xf32> -> vector<8x256xf32>
    %407 = math.tanh %403 : vector<8x256xf32>
    %408 = arith.mulf %406, %407 : vector<8x256xf32>
    %409 = vector.extract_strided_slice %408 {offsets = [0, 0], sizes = [8, 128], strides = [1, 1]} : vector<8x256xf32> to vector<8x128xf32>
    %410 = arith.mulf %409, %76 : vector<8x128xf32>
    %c56_106 = arith.constant 56 : index
    %c0_107 = arith.constant 0 : index
    %411 = vector.load %arg6[%c56_106, %c0_107] : memref<64x256xf32, #tpu.memory_space<vmem>>, vector<8x128xf32>
    tpu.vector_store %arg6[%c56_106, %c0_107], %410 {strides = array<i32>} : memref<64x256xf32, #tpu.memory_space<vmem>>, vector<8x128xf32>,
    %412 = arith.mulf %408, %156 : vector<8x256xf32>
    %413 = vector.extract_strided_slice %412 {offsets = [0, 128], sizes = [8, 128], strides = [1, 1]} : vector<8x256xf32> to vector<8x128xf32>
    %c0_108 = arith.constant 0 : index
    %c128_109 = arith.constant 128 : index
    %414 = vector.load %arg6[%c0_108, %c128_109] : memref<64x256xf32, #tpu.memory_space<vmem>>, vector<8x128xf32>
    tpu.vector_store %arg6[%c0_108, %c128_109], %413 {strides = array<i32>} : memref<64x256xf32, #tpu.memory_space<vmem>>, vector<8x128xf32>,
    %c0_110 = arith.constant 0 : index
    %c0_111 = arith.constant 0 : index
    %415 = vector.load %arg6[%c0_110, %c0_111] : memref<64x256xf32, #tpu.memory_space<vmem>>, vector<64x256xf32>
    %c0_112 = arith.constant 0 : index
    %c0_113 = arith.constant 0 : index
    %416 = vector.load %arg3[%c0_112, %c0_113] : memref<256x128xf32, #tpu.memory_space<vmem>>, vector<256x128xf32>
    %cst_114 = arith.constant dense<0.000000e+00> : vector<64x128xf32>
    %417 = tpu.matmul %415, %416, %cst_114 {dimension_numbers = #tpu.dot_dimension_numbers<[1], [0], [0], [1], [0, 0, 1, 1], [], []>} : vector<64x256xf32>, vector<256x128xf32>, vector<64x128xf32> -> vector<64x128xf32>
    %c0_115 = arith.constant 0 : index
    %c0_116 = arith.constant 0 : index
    %418 = vector.load %arg4[%c0_115, %c0_116] : memref<1x128xf32, #tpu.memory_space<vmem>>, vector<1x128xf32>
    %419 = vector.broadcast %418 : vector<1x128xf32> to vector<64x128xf32>
    %420 = arith.addf %417, %419 : vector<64x128xf32>
    %421 = vector.extract_strided_slice %420 {offsets = [0, 0], sizes = [8, 128], strides = [1, 1]} : vector<64x128xf32> to vector<8x128xf32>
    %422 = vector.extract_strided_slice %420 {offsets = [8, 0], sizes = [8, 128], strides = [1, 1]} : vector<64x128xf32> to vector<8x128xf32>
    %423 = vector.extract_strided_slice %420 {offsets = [16, 0], sizes = [8, 128], strides = [1, 1]} : vector<64x128xf32> to vector<8x128xf32>
    %424 = vector.extract_strided_slice %420 {offsets = [24, 0], sizes = [8, 128], strides = [1, 1]} : vector<64x128xf32> to vector<8x128xf32>
    %425 = vector.extract_strided_slice %420 {offsets = [32, 0], sizes = [8, 128], strides = [1, 1]} : vector<64x128xf32> to vector<8x128xf32>
    %426 = vector.extract_strided_slice %420 {offsets = [40, 0], sizes = [8, 128], strides = [1, 1]} : vector<64x128xf32> to vector<8x128xf32>
    %427 = vector.extract_strided_slice %420 {offsets = [48, 0], sizes = [8, 128], strides = [1, 1]} : vector<64x128xf32> to vector<8x128xf32>
    %428 = vector.extract_strided_slice %420 {offsets = [56, 0], sizes = [8, 128], strides = [1, 1]} : vector<64x128xf32> to vector<8x128xf32>
    %429 = arith.maximumf %421, %422 : vector<8x128xf32>
    %430 = arith.maximumf %429, %423 : vector<8x128xf32>
    %431 = arith.maximumf %430, %424 : vector<8x128xf32>
    %432 = arith.maximumf %431, %425 : vector<8x128xf32>
    %433 = arith.maximumf %432, %426 : vector<8x128xf32>
    %434 = arith.maximumf %433, %427 : vector<8x128xf32>
    %435 = arith.maximumf %434, %428 : vector<8x128xf32>
    %cst_117 = arith.constant 0.000000e+00 : f32
    %436 = vector.broadcast %cst_117 : f32 to vector<8x128xf32>
    %437 = arith.subf %421, %435 : vector<8x128xf32>
    %438 = math.exp %437 : vector<8x128xf32>
    %439 = arith.addf %436, %438 : vector<8x128xf32>
    %440 = arith.subf %422, %435 : vector<8x128xf32>
    %441 = math.exp %440 : vector<8x128xf32>
    %442 = arith.addf %439, %441 : vector<8x128xf32>
    %443 = arith.subf %423, %435 : vector<8x128xf32>
    %444 = math.exp %443 : vector<8x128xf32>
    %445 = arith.addf %442, %444 : vector<8x128xf32>
    %446 = arith.subf %424, %435 : vector<8x128xf32>
    %447 = math.exp %446 : vector<8x128xf32>
    %448 = arith.addf %445, %447 : vector<8x128xf32>
    %449 = arith.subf %425, %435 : vector<8x128xf32>
    %450 = math.exp %449 : vector<8x128xf32>
    %451 = arith.addf %448, %450 : vector<8x128xf32>
    %452 = arith.subf %426, %435 : vector<8x128xf32>
    %453 = math.exp %452 : vector<8x128xf32>
    %454 = arith.addf %451, %453 : vector<8x128xf32>
    %455 = arith.subf %427, %435 : vector<8x128xf32>
    %456 = math.exp %455 : vector<8x128xf32>
    %457 = arith.addf %454, %456 : vector<8x128xf32>
    %458 = arith.subf %428, %435 : vector<8x128xf32>
    %459 = math.exp %458 : vector<8x128xf32>
    %460 = arith.addf %457, %459 : vector<8x128xf32>
    %461 = math.log %460 : vector<8x128xf32>
    %462 = arith.addf %461, %435 : vector<8x128xf32>
    %463 = arith.subf %421, %462 : vector<8x128xf32>
    %c0_118 = arith.constant 0 : index
    %c0_119 = arith.constant 0 : index
    %c0_120 = arith.constant 0 : index
    %464 = vector.load %arg5[%c0_118, %c0_119, %c0_120] : memref<8x8x128xf32, #tpu.memory_space<vmem>>, vector<1x8x128xf32>
    %465 = vector.shape_cast %464 : vector<1x8x128xf32> to vector<8x128xf32>
    %466 = vector.shape_cast %463 : vector<8x128xf32> to vector<1x8x128xf32>
    tpu.vector_store %arg5[%c0_118, %c0_119, %c0_120], %466 {strides = array<i32>} : memref<8x8x128xf32, #tpu.memory_space<vmem>>, vector<1x8x128xf32>,
    %467 = arith.subf %422, %462 : vector<8x128xf32>
    %c1_121 = arith.constant 1 : index
    %c0_122 = arith.constant 0 : index
    %c0_123 = arith.constant 0 : index
    %468 = vector.load %arg5[%c1_121, %c0_122, %c0_123] : memref<8x8x128xf32, #tpu.memory_space<vmem>>, vector<1x8x128xf32>
    %469 = vector.shape_cast %468 : vector<1x8x128xf32> to vector<8x128xf32>
    %470 = vector.shape_cast %467 : vector<8x128xf32> to vector<1x8x128xf32>
    tpu.vector_store %arg5[%c1_121, %c0_122, %c0_123], %470 {strides = array<i32>} : memref<8x8x128xf32, #tpu.memory_space<vmem>>, vector<1x8x128xf32>,
    %471 = arith.subf %423, %462 : vector<8x128xf32>
    %c2_124 = arith.constant 2 : index
    %c0_125 = arith.constant 0 : index
    %c0_126 = arith.constant 0 : index
    %472 = vector.load %arg5[%c2_124, %c0_125, %c0_126] : memref<8x8x128xf32, #tpu.memory_space<vmem>>, vector<1x8x128xf32>
    %473 = vector.shape_cast %472 : vector<1x8x128xf32> to vector<8x128xf32>
    %474 = vector.shape_cast %471 : vector<8x128xf32> to vector<1x8x128xf32>
    tpu.vector_store %arg5[%c2_124, %c0_125, %c0_126], %474 {strides = array<i32>} : memref<8x8x128xf32, #tpu.memory_space<vmem>>, vector<1x8x128xf32>,
    %475 = arith.subf %424, %462 : vector<8x128xf32>
    %c3_127 = arith.constant 3 : index
    %c0_128 = arith.constant 0 : index
    %c0_129 = arith.constant 0 : index
    %476 = vector.load %arg5[%c3_127, %c0_128, %c0_129] : memref<8x8x128xf32, #tpu.memory_space<vmem>>, vector<1x8x128xf32>
    %477 = vector.shape_cast %476 : vector<1x8x128xf32> to vector<8x128xf32>
    %478 = vector.shape_cast %475 : vector<8x128xf32> to vector<1x8x128xf32>
    tpu.vector_store %arg5[%c3_127, %c0_128, %c0_129], %478 {strides = array<i32>} : memref<8x8x128xf32, #tpu.memory_space<vmem>>, vector<1x8x128xf32>,
    %479 = arith.subf %425, %462 : vector<8x128xf32>
    %c4_130 = arith.constant 4 : index
    %c0_131 = arith.constant 0 : index
    %c0_132 = arith.constant 0 : index
    %480 = vector.load %arg5[%c4_130, %c0_131, %c0_132] : memref<8x8x128xf32, #tpu.memory_space<vmem>>, vector<1x8x128xf32>
    %481 = vector.shape_cast %480 : vector<1x8x128xf32> to vector<8x128xf32>
    %482 = vector.shape_cast %479 : vector<8x128xf32> to vector<1x8x128xf32>
    tpu.vector_store %arg5[%c4_130, %c0_131, %c0_132], %482 {strides = array<i32>} : memref<8x8x128xf32, #tpu.memory_space<vmem>>, vector<1x8x128xf32>,
    %483 = arith.subf %426, %462 : vector<8x128xf32>
    %c5_133 = arith.constant 5 : index
    %c0_134 = arith.constant 0 : index
    %c0_135 = arith.constant 0 : index
    %484 = vector.load %arg5[%c5_133, %c0_134, %c0_135] : memref<8x8x128xf32, #tpu.memory_space<vmem>>, vector<1x8x128xf32>
    %485 = vector.shape_cast %484 : vector<1x8x128xf32> to vector<8x128xf32>
    %486 = vector.shape_cast %483 : vector<8x128xf32> to vector<1x8x128xf32>
    tpu.vector_store %arg5[%c5_133, %c0_134, %c0_135], %486 {strides = array<i32>} : memref<8x8x128xf32, #tpu.memory_space<vmem>>, vector<1x8x128xf32>,
    %487 = arith.subf %427, %462 : vector<8x128xf32>
    %c6_136 = arith.constant 6 : index
    %c0_137 = arith.constant 0 : index
    %c0_138 = arith.constant 0 : index
    %488 = vector.load %arg5[%c6_136, %c0_137, %c0_138] : memref<8x8x128xf32, #tpu.memory_space<vmem>>, vector<1x8x128xf32>
    %489 = vector.shape_cast %488 : vector<1x8x128xf32> to vector<8x128xf32>
    %490 = vector.shape_cast %487 : vector<8x128xf32> to vector<1x8x128xf32>
    tpu.vector_store %arg5[%c6_136, %c0_137, %c0_138], %490 {strides = array<i32>} : memref<8x8x128xf32, #tpu.memory_space<vmem>>, vector<1x8x128xf32>,
    %491 = arith.subf %428, %462 : vector<8x128xf32>
    %c7_139 = arith.constant 7 : index
    %c0_140 = arith.constant 0 : index
    %c0_141 = arith.constant 0 : index
    %492 = vector.load %arg5[%c7_139, %c0_140, %c0_141] : memref<8x8x128xf32, #tpu.memory_space<vmem>>, vector<1x8x128xf32>
    %493 = vector.shape_cast %492 : vector<1x8x128xf32> to vector<8x128xf32>
    %494 = vector.shape_cast %491 : vector<8x128xf32> to vector<1x8x128xf32>
    tpu.vector_store %arg5[%c7_139, %c0_140, %c0_141], %494 {strides = array<i32>} : memref<8x8x128xf32, #tpu.memory_space<vmem>>, vector<1x8x128xf32>,
    return
  }
}

</mosaic_0001>

<llo_original>
// kernel: bilstm_forward.1
$region0: #{bilstm_forward.1}
  #allocation0 [shape = 'u32[]', space=smem, size = 0x4, offset = 0x4, fixed_abs, tag = 'smem constant byte address 0x4 - core index']
  #allocation1 [shape = 'u32[144,128]{1,0:T(1,128)}', space=vmem, size = 0x12000, scoped, tag = 'internal scratch']
  #allocation2 [shape = 'f32[64,256]{1,0:T(8,128)}', space=vmem, size = 0x10000, scoped, tag = 'scratch operand']
  %s0 = inlined_call_operand.vmem [shape: s32[8,1], index: 0, kind: input, shape index: {}]
  %s1 = inlined_call_operand.vmem [shape: f32[8,8,256], index: 1, kind: input, shape index: {}]
  %s2 = inlined_call_operand.vmem [shape: f32[256,256], index: 2, kind: input, shape index: {}]
  %s3 = inlined_call_operand.vmem [shape: f32[256,128], index: 3, kind: input, shape index: {}]
  %s4 = inlined_call_operand.vmem [shape: f32[1,128], index: 4, kind: input, shape index: {}]
  %s5 = inlined_call_operand.vmem [shape: f32[8,8,128], index: 5, kind: output, shape index: {}]
  %s6 = sld [smem:[#allocation0]]
  $region30: #{bilstm_forward.1} parent=0
    _
  %s8 = ssub.s32 1, %s6
  %s9 = scalar_select 0, %s8, %s6
  // Predicated region
  $region2: #{bilstm_forward.1} parent=0 // pred_check
    _
  $region3: #{bilstm_forward.1} parent=0 // pred_check_branch
    %11 = sbr.rel (0) target = $region5
  $region4: #{bilstm_forward.1} parent=0 // pred_region
    _
  $region5: #{bilstm_forward.1} parent=0 // pred_fallthru
    _
  // Predicated region
  $region6: #{bilstm_forward.1} parent=0 // pred_check
    _
  $region7: #{bilstm_forward.1} parent=0 // pred_check_branch
    %13 = sbr.rel (0) target = $region9
  $region8: #{bilstm_forward.1} parent=0 // pred_region
    _
  $region9: #{bilstm_forward.1} parent=0 // pred_fallthru
    _
  // Predicated region
  $region10: #{bilstm_forward.1} parent=0 // pred_check
    _
  $region11: #{bilstm_forward.1} parent=0 // pred_check_branch
    %15 = sbr.rel (0) target = $region13
  $region12: #{bilstm_forward.1} parent=0 // pred_region
    _
  $region13: #{bilstm_forward.1} parent=0 // pred_fallthru
    _
  // Predicated region
  $region14: #{bilstm_forward.1} parent=0 // pred_check
    _
  $region15: #{bilstm_forward.1} parent=0 // pred_check_branch
    %17 = sbr.rel (0) target = $region17
  $region16: #{bilstm_forward.1} parent=0 // pred_region
    _
  $region17: #{bilstm_forward.1} parent=0 // pred_fallthru
    _
  // Predicated region
  $region18: #{bilstm_forward.1} parent=0 // pred_check
    _
  $region19: #{bilstm_forward.1} parent=0 // pred_check_branch
    %19 = sbr.rel (0) target = $region21
  $region20: #{bilstm_forward.1} parent=0 // pred_region
    _
  $region21: #{bilstm_forward.1} parent=0 // pred_fallthru
    _
  %v20 = vld [vmem:[%s0] sm:$0xff]
  %v21 = vlaneseq
  %v22 = vand.u32 %v21, 127
  %v23 = vadd.s32 %v22, 128
  %vm24 = vcmp.lt.s32.totalorder %v22, 0
  %v25 = vsub.s32 0, %v22
  %v26 = vsel %vm24, %v25, %v22
  %v27 = vshrl.u32 %v26, 7
  %v28 = vand.u32 %v26, 127
  %v29 = vsub.s32 0, %v28
  %v30 = vsel %vm24, %v29, %v28
  %vm31 = vcmp.lt.s32.totalorder %v23, 0
  %v32 = vsub.s32 0, %v23
  %v33 = vsel %vm31, %v32, %v23
  %v34 = vshrl.u32 %v33, 7
  %v35 = vand.u32 %v33, 127
  %v36 = vsub.s32 0, %v35
  %v37 = vsel %vm31, %v36, %v35
  %vm38 = vcmp.ne.s32.totalorder %v30, 0
  %vm39 = vcmp.ne.s32.totalorder %v37, 0
  %vm40 = vcmp.lt.s32.totalorder %v30, 0
  %vm41 = vcmp.lt.s32.totalorder %v37, 0
  %vm42 = vmand %vm40, %vm38
  %vm43 = vmand %vm41, %vm39
  %v44 = vadd.s32 %v30, 128
  %v45 = vadd.s32 %v37, 128
  %v46 = vsel %vm42, %v44, %v30
  %v47 = vsel %vm43, %v45, %v37
  %vm48 = vcmp.ge.s32.totalorder %v46, 32
  %vm49 = vcmp.ge.s32.totalorder %v47, 32
  %vm50 = vcmp.lt.s32.totalorder %v46, 64
  %vm51 = vcmp.lt.s32.totalorder %v47, 64
  %vm52 = vmand %vm48, %vm50
  %vm53 = vmand %vm49, %vm51
  %v54 = vsel %vm52, 1.0, 0.5
  %v55 = vsel %vm53, 1.0, 0.5
  %v56 = vsel %vm52, 0.0, 0.5
  %v57 = vsel %vm53, 0.0, 0.5
  %vm58 = vcmp.gt.s32.totalorder %v20, 0
  %v59 = vsel %vm58, 1, 0
  %v60 = vcvt.s32.f32 %v59
  %62 = vset.pattern.permute.xlu0 0
  %63 = vperm.xlu0 %62, %v60
  %v64 = vpop.permute.xlu0 %63
  %vm66 = vcmp.gt.s32.totalorder %v20, 1
  %v67 = vsel %vm66, 1, 0
  %v68 = vcvt.s32.f32 %v67
  %70 = vset.pattern.permute.xlu0 0
  %71 = vperm.xlu0 %70, %v68
  %v72 = vpop.permute.xlu0 %71
  %vm74 = vcmp.gt.s32.totalorder %v20, 2
  %v75 = vsel %vm74, 1, 0
  %v76 = vcvt.s32.f32 %v75
  %78 = vset.pattern.permute.xlu0 0
  %79 = vperm.xlu0 %78, %v76
  %v80 = vpop.permute.xlu0 %79
  %vm82 = vcmp.gt.s32.totalorder %v20, 3
  %v83 = vsel %vm82, 1, 0
  %v84 = vcvt.s32.f32 %v83
  %86 = vset.pattern.permute.xlu0 0
  %87 = vperm.xlu0 %86, %v84
  %v88 = vpop.permute.xlu0 %87
  %vm90 = vcmp.gt.s32.totalorder %v20, 4
  %v91 = vsel %vm90, 1, 0
  %v92 = vcvt.s32.f32 %v91
  %94 = vset.pattern.permute.xlu0 0
  %95 = vperm.xlu0 %94, %v92
  %v96 = vpop.permute.xlu0 %95
  %vm98 = vcmp.gt.s32.totalorder %v20, 5
  %v99 = vsel %vm98, 1, 0
  %v100 = vcvt.s32.f32 %v99
  %102 = vset.pattern.permute.xlu0 0
  %103 = vperm.xlu0 %102, %v100
  %v104 = vpop.permute.xlu0 %103
  %vm106 = vcmp.gt.s32.totalorder %v20, 6
  %v107 = vsel %vm106, 1, 0
  %v108 = vcvt.s32.f32 %v107
  %110 = vset.pattern.permute.xlu0 0
  %111 = vperm.xlu0 %110, %v108
  %v112 = vpop.permute.xlu0 %111
  %vm114 = vcmp.gt.s32.totalorder %v20, 7
  %v115 = vsel %vm114, 1, 0
  %v116 = vcvt.s32.f32 %v115
  %118 = vset.pattern.permute.xlu0 0
  %119 = vperm.xlu0 %118, %v116
  %v120 = vpop.permute.xlu0 %119
  %vm122 = vcmp.lt.s32.totalorder %v22, 128
  %vm123 = vcmp.lt.s32.totalorder %v23, 128
  %v124 = vsel %vm122, 1.0, %v120
  %v125 = vsel %vm123, 1.0, %v120
  %v126 = vsel %vm122, 1.0, %v112
  %v127 = vsel %vm123, 1.0, %v112
  %v128 = vsel %vm122, 1.0, %v104
  %v129 = vsel %vm123, 1.0, %v104
  %v130 = vsel %vm122, 1.0, %v96
  %v131 = vsel %vm123, 1.0, %v96
  %v132 = vsel %vm122, 1.0, %v88
  %v133 = vsel %vm123, 1.0, %v88
  %v134 = vsel %vm122, 1.0, %v80
  %v135 = vsel %vm123, 1.0, %v80
  %v136 = vsel %vm122, 1.0, %v72
  %v137 = vsel %vm123, 1.0, %v72
  %v138 = vsel %vm123, 1.0, %v64
  %v139 = vld [vmem:[%s2] sm:$0xff]
  %v140 = vld [vmem:[%s2 + $0x8] sm:$0xff]
  %v141 = vld [vmem:[%s2 + $0x10] sm:$0xff]
  %v142 = vld [vmem:[%s2 + $0x18] sm:$0xff]
  %v143 = vld [vmem:[%s2 + $0x20] sm:$0xff]
  %v144 = vld [vmem:[%s2 + $0x28] sm:$0xff]
  %v145 = vld [vmem:[%s2 + $0x30] sm:$0xff]
  %v146 = vld [vmem:[%s2 + $0x38] sm:$0xff]
  %v147 = vld [vmem:[%s2 + $0x40] sm:$0xff]
  %v148 = vld [vmem:[%s2 + $0x48] sm:$0xff]
  %v149 = vld [vmem:[%s2 + $0x50] sm:$0xff]
  %v150 = vld [vmem:[%s2 + $0x58] sm:$0xff]
  %v151 = vld [vmem:[%s2 + $0x60] sm:$0xff]
  %v152 = vld [vmem:[%s2 + $0x68] sm:$0xff]
  %v153 = vld [vmem:[%s2 + $0x70] sm:$0xff]
  %v154 = vld [vmem:[%s2 + $0x78] sm:$0xff]
  %v155 = vld [vmem:[%s2 + $0x80] sm:$0xff]
  %v156 = vld [vmem:[%s2 + $0x88] sm:$0xff]
  %v157 = vld [vmem:[%s2 + $0x90] sm:$0xff]
  %v158 = vld [vmem:[%s2 + $0x98] sm:$0xff]
  %v159 = vld [vmem:[%s2 + $0xa0] sm:$0xff]
  %v160 = vld [vmem:[%s2 + $0xa8] sm:$0xff]
  %v161 = vld [vmem:[%s2 + $0xb0] sm:$0xff]
  %v162 = vld [vmem:[%s2 + $0xb8] sm:$0xff]
  %v163 = vld [vmem:[%s2 + $0xc0] sm:$0xff]
  %v164 = vld [vmem:[%s2 + $0xc8] sm:$0xff]
  %v165 = vld [vmem:[%s2 + $0xd0] sm:$0xff]
  %v166 = vld [vmem:[%s2 + $0xd8] sm:$0xff]
  %v167 = vld [vmem:[%s2 + $0xe0] sm:$0xff]
  %v168 = vld [vmem:[%s2 + $0xe8] sm:$0xff]
  %v169 = vld [vmem:[%s2 + $0xf0] sm:$0xff]
  %v170 = vld [vmem:[%s2 + $0xf8] sm:$0xff]
  %v171 = vld [vmem:[%s2 + $0x100] sm:$0xff]
  %v172 = vld [vmem:[%s2 + $0x108] sm:$0xff]
  %v173 = vld [vmem:[%s2 + $0x110] sm:$0xff]
  %v174 = vld [vmem:[%s2 + $0x118] sm:$0xff]
  %v175 = vld [vmem:[%s2 + $0x120] sm:$0xff]
  %v176 = vld [vmem:[%s2 + $0x128] sm:$0xff]
  %v177 = vld [vmem:[%s2 + $0x130] sm:$0xff]
  %v178 = vld [vmem:[%s2 + $0x138] sm:$0xff]
  %v179 = vld [vmem:[%s2 + $0x140] sm:$0xff]
  %v180 = vld [vmem:[%s2 + $0x148] sm:$0xff]
  %v181 = vld [vmem:[%s2 + $0x150] sm:$0xff]
  %v182 = vld [vmem:[%s2 + $0x158] sm:$0xff]
  %v183 = vld [vmem:[%s2 + $0x160] sm:$0xff]
  %v184 = vld [vmem:[%s2 + $0x168] sm:$0xff]
  %v185 = vld [vmem:[%s2 + $0x170] sm:$0xff]
  %v186 = vld [vmem:[%s2 + $0x178] sm:$0xff]
  %v187 = vld [vmem:[%s2 + $0x180] sm:$0xff]
  %v188 = vld [vmem:[%s2 + $0x188] sm:$0xff]
  %v189 = vld [vmem:[%s2 + $0x190] sm:$0xff]
  %v190 = vld [vmem:[%s2 + $0x198] sm:$0xff]
  %v191 = vld [vmem:[%s2 + $0x1a0] sm:$0xff]
  %v192 = vld [vmem:[%s2 + $0x1a8] sm:$0xff]
  %v193 = vld [vmem:[%s2 + $0x1b0] sm:$0xff]
  %v194 = vld [vmem:[%s2 + $0x1b8] sm:$0xff]
  %v195 = vld [vmem:[%s2 + $0x1c0] sm:$0xff]
  %v196 = vld [vmem:[%s2 + $0x1c8] sm:$0xff]
  %v197 = vld [vmem:[%s2 + $0x1d0] sm:$0xff]
  %v198 = vld [vmem:[%s2 + $0x1d8] sm:$0xff]
  %v199 = vld [vmem:[%s2 + $0x1e0] sm:$0xff]
  %v200 = vld [vmem:[%s2 + $0x1e8] sm:$0xff]
  %v201 = vld [vmem:[%s2 + $0x1f0] sm:$0xff]
  %v202 = vld [vmem:[%s2 + $0x1f8] sm:$0xff]
  %v203 = vld [vmem:[%s1] sm:$0xff]
  %s204 = scalar_lea.vmem %s1, 112
  %v205 = vld [vmem:[%s204 + $0x8] sm:$0xff]
  %206 = vmatprep.subr.mxu0 %v140
  %207 = vmatpush1.msra.mxu0 %v139
  %208 = vmatprep.subr.mxu0 %v142
  %209 = vmatpush1.msra.mxu0 %v141
  %210 = vmatprep.subr.mxu0 %v144
  %211 = vmatpush1.msra.mxu0 %v143
  %212 = vmatprep.subr.mxu0 %v146
  %213 = vmatpush1.msra.mxu0 %v145
  %214 = vmatprep.subr.mxu0 %v148
  %215 = vmatpush1.msra.mxu0 %v147
  %216 = vmatprep.subr.mxu0 %v150
  %217 = vmatpush1.msra.mxu0 %v149
  %218 = vmatprep.subr.mxu0 %v152
  %219 = vmatpush1.msra.mxu0 %v151
  %220 = vmatprep.subr.mxu0 %v154
  %221 = vmatpush1.msra.mxu0 %v153
  %222 = vmatprep.subr.mxu0 %v156
  %223 = vmatpush1.msra.mxu0 %v155
  %224 = vmatprep.subr.mxu0 %v158
  %225 = vmatpush1.msra.mxu0 %v157
  %226 = vmatprep.subr.mxu0 %v160
  %227 = vmatpush1.msra.mxu0 %v159
  %228 = vmatprep.subr.mxu0 %v162
  %229 = vmatpush1.msra.mxu0 %v161
  %230 = vmatprep.subr.mxu0 %v164
  %231 = vmatpush1.msra.mxu0 %v163
  %232 = vmatprep.subr.mxu0 %v166
  %233 = vmatpush1.msra.mxu0 %v165
  %234 = vmatprep.subr.mxu0 %v168
  %235 = vmatpush1.msra.mxu0 %v167
  %236 = vmatprep.subr.mxu0 %v170
  %237 = vmatpush1.msra.mxu0 %v169
  %238 = vmatprep.subr.mxu0 %v172
  %239 = vmatpush1.msra.mxu0 %v171
  %240 = vmatprep.subr.mxu0 %v174
  %241 = vmatpush1.msra.mxu0 %v173
  %242 = vmatprep.subr.mxu0 %v176
  %243 = vmatpush1.msra.mxu0 %v175
  %244 = vmatprep.subr.mxu0 %v178
  %245 = vmatpush1.msra.mxu0 %v177
  %246 = vmatprep.subr.mxu0 %v180
  %247 = vmatpush1.msra.mxu0 %v179
  %248 = vmatprep.subr.mxu0 %v182
  %249 = vmatpush1.msra.mxu0 %v181
  %250 = vmatprep.subr.mxu0 %v184
  %251 = vmatpush1.msra.mxu0 %v183
  %252 = vmatprep.subr.mxu0 %v186
  %253 = vmatpush1.msra.mxu0 %v185
  %254 = vmatprep.subr.mxu0 %v188
  %255 = vmatpush1.msra.mxu0 %v187
  %256 = vmatprep.subr.mxu0 %v190
  %257 = vmatpush1.msra.mxu0 %v189
  %258 = vmatprep.subr.mxu0 %v192
  %259 = vmatpush1.msra.mxu0 %v191
  %260 = vmatprep.subr.mxu0 %v194
  %261 = vmatpush1.msra.mxu0 %v193
  %262 = vmatprep.subr.mxu0 %v196
  %263 = vmatpush1.msra.mxu0 %v195
  %264 = vmatprep.subr.mxu0 %v198
  %265 = vmatpush1.msra.mxu0 %v197
  %266 = vmatprep.subr.mxu0 %v200
  %267 = vmatpush1.msra.mxu0 %v199
  %268 = vmatprep.subr.mxu0 %v202
  %269 = vmatpush1.msra.mxu0 %v201
  %270 = vmatprep.mubr.f32.mxu0 0.0
  %271 = vmatmul.mubr.f32.gmra.mrb[0].mxu0 0.0
  %v272 = vpop.f32.mrb[0].mxu0
  %v273 = vadd.f32 0.0, %v272
  %v274 = vpop.f32.mrb[0].mxu0
  %v275 = vadd.f32 0.0, %v274
  %276 = vdwg.mxu0
  %v277 = vadd.f32 %v203, %v273
  %v278 = vadd.f32 %v205, %v275
  %v279 = vmul.f32 %v54, %v277
  %v280 = vmul.f32 %v55, %v278
  %v281 = vtanh.pop %v279
  %v282 = vtanh.pop %v280
  %v283 = vmul.f32 %v54, %v281
  %v284 = vmul.f32 %v55, %v282
  %v285 = vadd.f32 %v56, %v283
  %v286 = vadd.f32 %v57, %v284
  %v287 = vmul.f32 %v285, 0.0
  %v288 = vmul.f32 %v286, 0.0
  %290 = vrot.lane.b32.xlu0 %v286, 96
  %v291 = vpop.permute.xlu0 %290
  %294 = vrot.lane.b32.xlu0 %v285, 96
  %v295 = vpop.permute.xlu0 %294
  %vm296 = vcmask 785408
  %v297 = vsel %vm296, %v295, %v291
  %v300 = vsel %vm296, %v291, %v295
  %301 = vrot.lane.b32.xlu0 %v286, 64
  %v302 = vpop.permute.xlu0 %301
  %304 = vrot.lane.b32.xlu0 %v285, 64
  %v305 = vpop.permute.xlu0 %304
  %vm306 = vcmask 523264
  %v307 = vsel %vm306, %v305, %v302
  %v310 = vsel %vm306, %v302, %v305
  %v311 = vmul.f32 %v300, %v310
  %v312 = vmul.f32 %v297, %v307
  %v313 = vadd.f32 %v287, %v311
  %v314 = vadd.f32 %v288, %v312
  %315 = vrot.lane.b32.xlu0 %v286, 32
  %v316 = vpop.permute.xlu0 %315
  %318 = vrot.lane.b32.xlu0 %v285, 32
  %v319 = vpop.permute.xlu0 %318
  %vm320 = vcmask 261120
  %v321 = vsel %vm320, %v319, %v316
  %v324 = vsel %vm320, %v316, %v319
  %v325 = vtanh.pop %v313
  %v326 = vtanh.pop %v314
  %v327 = vmul.f32 %v324, %v325
  %v328 = vmul.f32 %v321, %v326
  %v329 = vmul.f32 %v327, %v64
  %330 = vst [vmem:[#allocation2] sm:$0xff] %v329
  %v331 = vmul.f32 %v327, %v124
  %v332 = vmul.f32 %v328, %v125
  %v333 = vmul.f32 %v313, %v124
  %v334 = vmul.f32 %v314, %v125
  %335 = vst [vmem:[#allocation2 + $0x78] sm:$0xff] %v332
  %s336 = scalar_lea.vmem %s1, 16
  %v337 = vld [vmem:[%s336] sm:$0xff]
  %s338 = scalar_lea.vmem %s1, 96
  %v339 = vld [vmem:[%s338 + $0x8] sm:$0xff]
  %340 = vmatprep.subr.mxu0 %v140
  %341 = vmatpush1.msra.mxu0 %v139
  %342 = vmatprep.subr.mxu0 %v142
  %343 = vmatpush1.msra.mxu0 %v141
  %344 = vmatprep.subr.mxu0 %v144
  %345 = vmatpush1.msra.mxu0 %v143
  %346 = vmatprep.subr.mxu0 %v146
  %347 = vmatpush1.msra.mxu0 %v145
  %348 = vmatprep.subr.mxu0 %v148
  %349 = vmatpush1.msra.mxu0 %v147
  %350 = vmatprep.subr.mxu0 %v150
  %351 = vmatpush1.msra.mxu0 %v149
  %352 = vmatprep.subr.mxu0 %v152
  %353 = vmatpush1.msra.mxu0 %v151
  %354 = vmatprep.subr.mxu0 %v154
  %355 = vmatpush1.msra.mxu0 %v153
  %356 = vmatprep.subr.mxu0 %v156
  %357 = vmatpush1.msra.mxu0 %v155
  %358 = vmatprep.subr.mxu0 %v158
  %359 = vmatpush1.msra.mxu0 %v157
  %360 = vmatprep.subr.mxu0 %v160
  %361 = vmatpush1.msra.mxu0 %v159
  %362 = vmatprep.subr.mxu0 %v162
  %363 = vmatpush1.msra.mxu0 %v161
  %364 = vmatprep.subr.mxu0 %v164
  %365 = vmatpush1.msra.mxu0 %v163
  %366 = vmatprep.subr.mxu0 %v166
  %367 = vmatpush1.msra.mxu0 %v165
  %368 = vmatprep.subr.mxu0 %v168
  %369 = vmatpush1.msra.mxu0 %v167
  %370 = vmatprep.subr.mxu0 %v170
  %371 = vmatpush1.msra.mxu0 %v169
  %372 = vmatprep.subr.mxu0 %v172
  %373 = vmatpush1.msra.mxu0 %v171
  %374 = vmatprep.subr.mxu0 %v174
  %375 = vmatpush1.msra.mxu0 %v173
  %376 = vmatprep.subr.mxu0 %v176
  %377 = vmatpush1.msra.mxu0 %v175
  %378 = vmatprep.subr.mxu0 %v178
  %379 = vmatpush1.msra.mxu0 %v177
  %380 = vmatprep.subr.mxu0 %v180
  %381 = vmatpush1.msra.mxu0 %v179
  %382 = vmatprep.subr.mxu0 %v182
  %383 = vmatpush1.msra.mxu0 %v181
  %384 = vmatprep.subr.mxu0 %v184
  %385 = vmatpush1.msra.mxu0 %v183
  %386 = vmatprep.subr.mxu0 %v186
  %387 = vmatpush1.msra.mxu0 %v185
  %388 = vmatprep.subr.mxu0 %v188
  %389 = vmatpush1.msra.mxu0 %v187
  %390 = vmatprep.subr.mxu0 %v190
  %391 = vmatpush1.msra.mxu0 %v189
  %392 = vmatprep.subr.mxu0 %v192
  %393 = vmatpush1.msra.mxu0 %v191
  %394 = vmatprep.subr.mxu0 %v194
  %395 = vmatpush1.msra.mxu0 %v193
  %396 = vmatprep.subr.mxu0 %v196
  %397 = vmatpush1.msra.mxu0 %v195
  %398 = vmatprep.subr.mxu0 %v198
  %399 = vmatpush1.msra.mxu0 %v197
  %400 = vmatprep.subr.mxu0 %v200
  %401 = vmatpush1.msra.mxu0 %v199
  %402 = vmatprep.subr.mxu0 %v202
  %403 = vmatpush1.msra.mxu0 %v201
  %404 = vmatprep.mubr.f32.mxu0 %v332
  %405 = vmatmul.mubr.f32.gmra.mrb[0].mxu0 %v331
  %v406 = vpop.f32.mrb[0].mxu0
  %v407 = vadd.f32 0.0, %v406
  %v408 = vpop.f32.mrb[0].mxu0
  %v409 = vadd.f32 0.0, %v408
  %410 = vdwg.mxu0
  %v411 = vadd.f32 %v337, %v407
  %v412 = vadd.f32 %v339, %v409
  %v413 = vmul.f32 %v54, %v411
  %v414 = vmul.f32 %v55, %v412
  %v415 = vtanh.pop %v413
  %v416 = vtanh.pop %v414
  %v417 = vmul.f32 %v54, %v415
  %v418 = vmul.f32 %v55, %v416
  %v419 = vadd.f32 %v56, %v417
  %v420 = vadd.f32 %v57, %v418
  %v421 = vmul.f32 %v419, %v333
  %v422 = vmul.f32 %v420, %v334
  %424 = vrot.lane.b32.xlu0 %v420, 96
  %v425 = vpop.permute.xlu0 %424
  %428 = vrot.lane.b32.xlu0 %v419, 96
  %v429 = vpop.permute.xlu0 %428
  %v430 = vsel %vm296, %v429, %v425
  %v433 = vsel %vm296, %v425, %v429
  %434 = vrot.lane.b32.xlu0 %v420, 64
  %v435 = vpop.permute.xlu0 %434
  %437 = vrot.lane.b32.xlu0 %v419, 64
  %v438 = vpop.permute.xlu0 %437
  %v439 = vsel %vm306, %v438, %v435
  %v442 = vsel %vm306, %v435, %v438
  %v443 = vmul.f32 %v433, %v442
  %v444 = vmul.f32 %v430, %v439
  %v445 = vadd.f32 %v421, %v443
  %v446 = vadd.f32 %v422, %v444
  %447 = vrot.lane.b32.xlu0 %v420, 32
  %v448 = vpop.permute.xlu0 %447
  %450 = vrot.lane.b32.xlu0 %v419, 32
  %v451 = vpop.permute.xlu0 %450
  %v452 = vsel %vm320, %v451, %v448
  %v455 = vsel %vm320, %v448, %v451
  %v456 = vtanh.pop %v445
  %v457 = vtanh.pop %v446
  %v458 = vmul.f32 %v455, %v456
  %v459 = vmul.f32 %v452, %v457
  %v460 = vmul.f32 %v458, %v72
  %461 = vst [vmem:[#allocation2 + $0x10] sm:$0xff] %v460
  %v462 = vmul.f32 %v458, %v126
  %v463 = vmul.f32 %v459, %v127
  %v464 = vmul.f32 %v445, %v126
  %v465 = vmul.f32 %v446, %v127
  %466 = vst [vmem:[#allocation2 + $0x68] sm:$0xff] %v463
  %s467 = scalar_lea.vmem %s1, 32
  %v468 = vld [vmem:[%s467] sm:$0xff]
  %s469 = scalar_lea.vmem %s1, 80
  %v470 = vld [vmem:[%s469 + $0x8] sm:$0xff]
  %471 = vmatprep.subr.mxu0 %v140
  %472 = vmatpush1.msra.mxu0 %v139
  %473 = vmatprep.subr.mxu0 %v142
  %474 = vmatpush1.msra.mxu0 %v141
  %475 = vmatprep.subr.mxu0 %v144
  %476 = vmatpush1.msra.mxu0 %v143
  %477 = vmatprep.subr.mxu0 %v146
  %478 = vmatpush1.msra.mxu0 %v145
  %479 = vmatprep.subr.mxu0 %v148
  %480 = vmatpush1.msra.mxu0 %v147
  %481 = vmatprep.subr.mxu0 %v150
  %482 = vmatpush1.msra.mxu0 %v149
  %483 = vmatprep.subr.mxu0 %v152
  %484 = vmatpush1.msra.mxu0 %v151
  %485 = vmatprep.subr.mxu0 %v154
  %486 = vmatpush1.msra.mxu0 %v153
  %487 = vmatprep.subr.mxu0 %v156
  %488 = vmatpush1.msra.mxu0 %v155
  %489 = vmatprep.subr.mxu0 %v158
  %490 = vmatpush1.msra.mxu0 %v157
  %491 = vmatprep.subr.mxu0 %v160
  %492 = vmatpush1.msra.mxu0 %v159
  %493 = vmatprep.subr.mxu0 %v162
  %494 = vmatpush1.msra.mxu0 %v161
  %495 = vmatprep.subr.mxu0 %v164
  %496 = vmatpush1.msra.mxu0 %v163
  %497 = vmatprep.subr.mxu0 %v166
  %498 = vmatpush1.msra.mxu0 %v165
  %499 = vmatprep.subr.mxu0 %v168
  %500 = vmatpush1.msra.mxu0 %v167
  %501 = vmatprep.subr.mxu0 %v170
  %502 = vmatpush1.msra.mxu0 %v169
  %503 = vmatprep.subr.mxu0 %v172
  %504 = vmatpush1.msra.mxu0 %v171
  %505 = vmatprep.subr.mxu0 %v174
  %506 = vmatpush1.msra.mxu0 %v173
  %507 = vmatprep.subr.mxu0 %v176
  %508 = vmatpush1.msra.mxu0 %v175
  %509 = vmatprep.subr.mxu0 %v178
  %510 = vmatpush1.msra.mxu0 %v177
  %511 = vmatprep.subr.mxu0 %v180
  %512 = vmatpush1.msra.mxu0 %v179
  %513 = vmatprep.subr.mxu0 %v182
  %514 = vmatpush1.msra.mxu0 %v181
  %515 = vmatprep.subr.mxu0 %v184
  %516 = vmatpush1.msra.mxu0 %v183
  %517 = vmatprep.subr.mxu0 %v186
  %518 = vmatpush1.msra.mxu0 %v185
  %519 = vmatprep.subr.mxu0 %v188
  %520 = vmatpush1.msra.mxu0 %v187
  %521 = vmatprep.subr.mxu0 %v190
  %522 = vmatpush1.msra.mxu0 %v189
  %523 = vmatprep.subr.mxu0 %v192
  %524 = vmatpush1.msra.mxu0 %v191
  %525 = vmatprep.subr.mxu0 %v194
  %526 = vmatpush1.msra.mxu0 %v193
  %527 = vmatprep.subr.mxu0 %v196
  %528 = vmatpush1.msra.mxu0 %v195
  %529 = vmatprep.subr.mxu0 %v198
  %530 = vmatpush1.msra.mxu0 %v197
  %531 = vmatprep.subr.mxu0 %v200
  %532 = vmatpush1.msra.mxu0 %v199
  %533 = vmatprep.subr.mxu0 %v202
  %534 = vmatpush1.msra.mxu0 %v201
  %535 = vmatprep.mubr.f32.mxu0 %v463
  %536 = vmatmul.mubr.f32.gmra.mrb[0].mxu0 %v462
  %v537 = vpop.f32.mrb[0].mxu0
  %v538 = vadd.f32 0.0, %v537
  %v539 = vpop.f32.mrb[0].mxu0
  %v540 = vadd.f32 0.0, %v539
  %541 = vdwg.mxu0
  %v542 = vadd.f32 %v468, %v538
  %v543 = vadd.f32 %v470, %v540
  %v544 = vmul.f32 %v54, %v542
  %v545 = vmul.f32 %v55, %v543
  %v546 = vtanh.pop %v544
  %v547 = vtanh.pop %v545
  %v548 = vmul.f32 %v54, %v546
  %v549 = vmul.f32 %v55, %v547
  %v550 = vadd.f32 %v56, %v548
  %v551 = vadd.f32 %v57, %v549
  %v552 = vmul.f32 %v550, %v464
  %v553 = vmul.f32 %v551, %v465
  %555 = vrot.lane.b32.xlu0 %v551, 96
  %v556 = vpop.permute.xlu0 %555
  %559 = vrot.lane.b32.xlu0 %v550, 96
  %v560 = vpop.permute.xlu0 %559
  %v561 = vsel %vm296, %v560, %v556
  %v564 = vsel %vm296, %v556, %v560
  %565 = vrot.lane.b32.xlu0 %v551, 64
  %v566 = vpop.permute.xlu0 %565
  %568 = vrot.lane.b32.xlu0 %v550, 64
  %v569 = vpop.permute.xlu0 %568
  %v570 = vsel %vm306, %v569, %v566
  %v573 = vsel %vm306, %v566, %v569
  %v574 = vmul.f32 %v564, %v573
  %v575 = vmul.f32 %v561, %v570
  %v576 = vadd.f32 %v552, %v574
  %v577 = vadd.f32 %v553, %v575
  %578 = vrot.lane.b32.xlu0 %v551, 32
  %v579 = vpop.permute.xlu0 %578
  %581 = vrot.lane.b32.xlu0 %v550, 32
  %v582 = vpop.permute.xlu0 %581
  %v583 = vsel %vm320, %v582, %v579
  %v586 = vsel %vm320, %v579, %v582
  %v587 = vtanh.pop %v576
  %v588 = vtanh.pop %v577
  %v589 = vmul.f32 %v586, %v587
  %v590 = vmul.f32 %v583, %v588
  %v591 = vmul.f32 %v589, %v80
  %592 = vst [vmem:[#allocation2 + $0x20] sm:$0xff] %v591
  %v593 = vmul.f32 %v589, %v128
  %v594 = vmul.f32 %v590, %v129
  %v595 = vmul.f32 %v576, %v128
  %v596 = vmul.f32 %v577, %v129
  %597 = vst [vmem:[#allocation2 + $0x58] sm:$0xff] %v594
  %s598 = scalar_lea.vmem %s1, 48
  %v599 = vld [vmem:[%s598] sm:$0xff]
  %s600 = scalar_lea.vmem %s1, 64
  %v601 = vld [vmem:[%s600 + $0x8] sm:$0xff]
  %602 = vmatprep.subr.mxu0 %v140
  %603 = vmatpush1.msra.mxu0 %v139
  %604 = vmatprep.subr.mxu0 %v142
  %605 = vmatpush1.msra.mxu0 %v141
  %606 = vmatprep.subr.mxu0 %v144
  %607 = vmatpush1.msra.mxu0 %v143
  %608 = vmatprep.subr.mxu0 %v146
  %609 = vmatpush1.msra.mxu0 %v145
  %610 = vmatprep.subr.mxu0 %v148
  %611 = vmatpush1.msra.mxu0 %v147
  %612 = vmatprep.subr.mxu0 %v150
  %613 = vmatpush1.msra.mxu0 %v149
  %614 = vmatprep.subr.mxu0 %v152
  %615 = vmatpush1.msra.mxu0 %v151
  %616 = vmatprep.subr.mxu0 %v154
  %617 = vmatpush1.msra.mxu0 %v153
  %618 = vmatprep.subr.mxu0 %v156
  %619 = vmatpush1.msra.mxu0 %v155
  %620 = vmatprep.subr.mxu0 %v158
  %621 = vmatpush1.msra.mxu0 %v157
  %622 = vmatprep.subr.mxu0 %v160
  %623 = vmatpush1.msra.mxu0 %v159
  %624 = vmatprep.subr.mxu0 %v162
  %625 = vmatpush1.msra.mxu0 %v161
  %626 = vmatprep.subr.mxu0 %v164
  %627 = vmatpush1.msra.mxu0 %v163
  %628 = vmatprep.subr.mxu0 %v166
  %629 = vmatpush1.msra.mxu0 %v165
  %630 = vmatprep.subr.mxu0 %v168
  %631 = vmatpush1.msra.mxu0 %v167
  %632 = vmatprep.subr.mxu0 %v170
  %633 = vmatpush1.msra.mxu0 %v169
  %634 = vmatprep.subr.mxu0 %v172
  %635 = vmatpush1.msra.mxu0 %v171
  %636 = vmatprep.subr.mxu0 %v174
  %637 = vmatpush1.msra.mxu0 %v173
  %638 = vmatprep.subr.mxu0 %v176
  %639 = vmatpush1.msra.mxu0 %v175
  %640 = vmatprep.subr.mxu0 %v178
  %641 = vmatpush1.msra.mxu0 %v177
  %642 = vmatprep.subr.mxu0 %v180
  %643 = vmatpush1.msra.mxu0 %v179
  %644 = vmatprep.subr.mxu0 %v182
  %645 = vmatpush1.msra.mxu0 %v181
  %646 = vmatprep.subr.mxu0 %v184
  %647 = vmatpush1.msra.mxu0 %v183
  %648 = vmatprep.subr.mxu0 %v186
  %649 = vmatpush1.msra.mxu0 %v185
  %650 = vmatprep.subr.mxu0 %v188
  %651 = vmatpush1.msra.mxu0 %v187
  %652 = vmatprep.subr.mxu0 %v190
  %653 = vmatpush1.msra.mxu0 %v189
  %654 = vmatprep.subr.mxu0 %v192
  %655 = vmatpush1.msra.mxu0 %v191
  %656 = vmatprep.subr.mxu0 %v194
  %657 = vmatpush1.msra.mxu0 %v193
  %658 = vmatprep.subr.mxu0 %v196
  %659 = vmatpush1.msra.mxu0 %v195
  %660 = vmatprep.subr.mxu0 %v198
  %661 = vmatpush1.msra.mxu0 %v197
  %662 = vmatprep.subr.mxu0 %v200
  %663 = vmatpush1.msra.mxu0 %v199
  %664 = vmatprep.subr.mxu0 %v202
  %665 = vmatpush1.msra.mxu0 %v201
  %666 = vmatprep.mubr.f32.mxu0 %v594
  %667 = vmatmul.mubr.f32.gmra.mrb[0].mxu0 %v593
  %v668 = vpop.f32.mrb[0].mxu0
  %v669 = vadd.f32 0.0, %v668
  %v670 = vpop.f32.mrb[0].mxu0
  %v671 = vadd.f32 0.0, %v670
  %672 = vdwg.mxu0
  %v673 = vadd.f32 %v599, %v669
  %v674 = vadd.f32 %v601, %v671
  %v675 = vmul.f32 %v54, %v673
  %v676 = vmul.f32 %v55, %v674
  %v677 = vtanh.pop %v675
  %v678 = vtanh.pop %v676
  %v679 = vmul.f32 %v54, %v677
  %v680 = vmul.f32 %v55, %v678
  %v681 = vadd.f32 %v56, %v679
  %v682 = vadd.f32 %v57, %v680
  %v683 = vmul.f32 %v681, %v595
  %v684 = vmul.f32 %v682, %v596
  %686 = vrot.lane.b32.xlu0 %v682, 96
  %v687 = vpop.permute.xlu0 %686
  %690 = vrot.lane.b32.xlu0 %v681, 96
  %v691 = vpop.permute.xlu0 %690
  %v692 = vsel %vm296, %v691, %v687
  %v695 = vsel %vm296, %v687, %v691
  %696 = vrot.lane.b32.xlu0 %v682, 64
  %v697 = vpop.permute.xlu0 %696
  %699 = vrot.lane.b32.xlu0 %v681, 64
  %v700 = vpop.permute.xlu0 %699
  %v701 = vsel %vm306, %v700, %v697
  %v704 = vsel %vm306, %v697, %v700
  %v705 = vmul.f32 %v695, %v704
  %v706 = vmul.f32 %v692, %v701
  %v707 = vadd.f32 %v683, %v705
  %v708 = vadd.f32 %v684, %v706
  %709 = vrot.lane.b32.xlu0 %v682, 32
  %v710 = vpop.permute.xlu0 %709
  %712 = vrot.lane.b32.xlu0 %v681, 32
  %v713 = vpop.permute.xlu0 %712
  %v714 = vsel %vm320, %v713, %v710
  %v717 = vsel %vm320, %v710, %v713
  %v718 = vtanh.pop %v707
  %v719 = vtanh.pop %v708
  %v720 = vmul.f32 %v717, %v718
  %v721 = vmul.f32 %v714, %v719
  %v722 = vmul.f32 %v720, %v88
  %723 = vst [vmem:[#allocation2 + $0x30] sm:$0xff] %v722
  %v724 = vmul.f32 %v720, %v130
  %v725 = vmul.f32 %v721, %v131
  %v726 = vmul.f32 %v707, %v130
  %v727 = vmul.f32 %v708, %v131
  %728 = vst [vmem:[#allocation2 + $0x48] sm:$0xff] %v725
  %v729 = vld [vmem:[%s600] sm:$0xff]
  %v730 = vld [vmem:[%s598 + $0x8] sm:$0xff]
  %731 = vmatprep.subr.mxu0 %v140
  %732 = vmatpush1.msra.mxu0 %v139
  %733 = vmatprep.subr.mxu0 %v142
  %734 = vmatpush1.msra.mxu0 %v141
  %735 = vmatprep.subr.mxu0 %v144
  %736 = vmatpush1.msra.mxu0 %v143
  %737 = vmatprep.subr.mxu0 %v146
  %738 = vmatpush1.msra.mxu0 %v145
  %739 = vmatprep.subr.mxu0 %v148
  %740 = vmatpush1.msra.mxu0 %v147
  %741 = vmatprep.subr.mxu0 %v150
  %742 = vmatpush1.msra.mxu0 %v149
  %743 = vmatprep.subr.mxu0 %v152
  %744 = vmatpush1.msra.mxu0 %v151
  %745 = vmatprep.subr.mxu0 %v154
  %746 = vmatpush1.msra.mxu0 %v153
  %747 = vmatprep.subr.mxu0 %v156
  %748 = vmatpush1.msra.mxu0 %v155
  %749 = vmatprep.subr.mxu0 %v158
  %750 = vmatpush1.msra.mxu0 %v157
  %751 = vmatprep.subr.mxu0 %v160
  %752 = vmatpush1.msra.mxu0 %v159
  %753 = vmatprep.subr.mxu0 %v162
  %754 = vmatpush1.msra.mxu0 %v161
  %755 = vmatprep.subr.mxu0 %v164
  %756 = vmatpush1.msra.mxu0 %v163
  %757 = vmatprep.subr.mxu0 %v166
  %758 = vmatpush1.msra.mxu0 %v165
  %759 = vmatprep.subr.mxu0 %v168
  %760 = vmatpush1.msra.mxu0 %v167
  %761 = vmatprep.subr.mxu0 %v170
  %762 = vmatpush1.msra.mxu0 %v169
  %763 = vmatprep.subr.mxu0 %v172
  %764 = vmatpush1.msra.mxu0 %v171
  %765 = vmatprep.subr.mxu0 %v174
  %766 = vmatpush1.msra.mxu0 %v173
  %767 = vmatprep.subr.mxu0 %v176
  %768 = vmatpush1.msra.mxu0 %v175
  %769 = vmatprep.subr.mxu0 %v178
  %770 = vmatpush1.msra.mxu0 %v177
  %771 = vmatprep.subr.mxu0 %v180
  %772 = vmatpush1.msra.mxu0 %v179
  %773 = vmatprep.subr.mxu0 %v182
  %774 = vmatpush1.msra.mxu0 %v181
  %775 = vmatprep.subr.mxu0 %v184
  %776 = vmatpush1.msra.mxu0 %v183
  %777 = vmatprep.subr.mxu0 %v186
  %778 = vmatpush1.msra.mxu0 %v185
  %779 = vmatprep.subr.mxu0 %v188
  %780 = vmatpush1.msra.mxu0 %v187
  %781 = vmatprep.subr.mxu0 %v190
  %782 = vmatpush1.msra.mxu0 %v189
  %783 = vmatprep.subr.mxu0 %v192
  %784 = vmatpush1.msra.mxu0 %v191
  %785 = vmatprep.subr.mxu0 %v194
  %786 = vmatpush1.msra.mxu0 %v193
  %787 = vmatprep.subr.mxu0 %v196
  %788 = vmatpush1.msra.mxu0 %v195
  %789 = vmatprep.subr.mxu0 %v198
  %790 = vmatpush1.msra.mxu0 %v197
  %791 = vmatprep.subr.mxu0 %v200
  %792 = vmatpush1.msra.mxu0 %v199
  %793 = vmatprep.subr.mxu0 %v202
  %794 = vmatpush1.msra.mxu0 %v201
  %795 = vmatprep.mubr.f32.mxu0 %v725
  %796 = vmatmul.mubr.f32.gmra.mrb[0].mxu0 %v724
  %v797 = vpop.f32.mrb[0].mxu0
  %v798 = vadd.f32 0.0, %v797
  %v799 = vpop.f32.mrb[0].mxu0
  %v800 = vadd.f32 0.0, %v799
  %801 = vdwg.mxu0
  %v802 = vadd.f32 %v729, %v798
  %v803 = vadd.f32 %v730, %v800
  %v804 = vmul.f32 %v54, %v802
  %v805 = vmul.f32 %v55, %v803
  %v806 = vtanh.pop %v804
  %v807 = vtanh.pop %v805
  %v808 = vmul.f32 %v54, %v806
  %v809 = vmul.f32 %v55, %v807
  %v810 = vadd.f32 %v56, %v808
  %v811 = vadd.f32 %v57, %v809
  %v812 = vmul.f32 %v810, %v726
  %v813 = vmul.f32 %v811, %v727
  %815 = vrot.lane.b32.xlu0 %v811, 96
  %v816 = vpop.permute.xlu0 %815
  %819 = vrot.lane.b32.xlu0 %v810, 96
  %v820 = vpop.permute.xlu0 %819
  %v821 = vsel %vm296, %v820, %v816
  %v824 = vsel %vm296, %v816, %v820
  %825 = vrot.lane.b32.xlu0 %v811, 64
  %v826 = vpop.permute.xlu0 %825
  %828 = vrot.lane.b32.xlu0 %v810, 64
  %v829 = vpop.permute.xlu0 %828
  %v830 = vsel %vm306, %v829, %v826
  %v833 = vsel %vm306, %v826, %v829
  %v834 = vmul.f32 %v824, %v833
  %v835 = vmul.f32 %v821, %v830
  %v836 = vadd.f32 %v812, %v834
  %v837 = vadd.f32 %v813, %v835
  %838 = vrot.lane.b32.xlu0 %v811, 32
  %v839 = vpop.permute.xlu0 %838
  %841 = vrot.lane.b32.xlu0 %v810, 32
  %v842 = vpop.permute.xlu0 %841
  %v843 = vsel %vm320, %v842, %v839
  %v846 = vsel %vm320, %v839, %v842
  %v847 = vtanh.pop %v836
  %v848 = vtanh.pop %v837
  %v849 = vmul.f32 %v846, %v847
  %v850 = vmul.f32 %v843, %v848
  %v851 = vmul.f32 %v849, %v96
  %852 = vst [vmem:[#allocation2 + $0x40] sm:$0xff] %v851
  %v853 = vmul.f32 %v849, %v132
  %v854 = vmul.f32 %v850, %v133
  %v855 = vmul.f32 %v836, %v132
  %v856 = vmul.f32 %v837, %v133
  %857 = vst [vmem:[#allocation2 + $0x38] sm:$0xff] %v854
  %v858 = vld [vmem:[%s469] sm:$0xff]
  %v859 = vld [vmem:[%s467 + $0x8] sm:$0xff]
  %860 = vmatprep.subr.mxu0 %v140
  %861 = vmatpush1.msra.mxu0 %v139
  %862 = vmatprep.subr.mxu0 %v142
  %863 = vmatpush1.msra.mxu0 %v141
  %864 = vmatprep.subr.mxu0 %v144
  %865 = vmatpush1.msra.mxu0 %v143
  %866 = vmatprep.subr.mxu0 %v146
  %867 = vmatpush1.msra.mxu0 %v145
  %868 = vmatprep.subr.mxu0 %v148
  %869 = vmatpush1.msra.mxu0 %v147
  %870 = vmatprep.subr.mxu0 %v150
  %871 = vmatpush1.msra.mxu0 %v149
  %872 = vmatprep.subr.mxu0 %v152
  %873 = vmatpush1.msra.mxu0 %v151
  %874 = vmatprep.subr.mxu0 %v154
  %875 = vmatpush1.msra.mxu0 %v153
  %876 = vmatprep.subr.mxu0 %v156
  %877 = vmatpush1.msra.mxu0 %v155
  %878 = vmatprep.subr.mxu0 %v158
  %879 = vmatpush1.msra.mxu0 %v157
  %880 = vmatprep.subr.mxu0 %v160
  %881 = vmatpush1.msra.mxu0 %v159
  %882 = vmatprep.subr.mxu0 %v162
  %883 = vmatpush1.msra.mxu0 %v161
  %884 = vmatprep.subr.mxu0 %v164
  %885 = vmatpush1.msra.mxu0 %v163
  %886 = vmatprep.subr.mxu0 %v166
  %887 = vmatpush1.msra.mxu0 %v165
  %888 = vmatprep.subr.mxu0 %v168
  %889 = vmatpush1.msra.mxu0 %v167
  %890 = vmatprep.subr.mxu0 %v170
  %891 = vmatpush1.msra.mxu0 %v169
  %892 = vmatprep.subr.mxu0 %v172
  %893 = vmatpush1.msra.mxu0 %v171
  %894 = vmatprep.subr.mxu0 %v174
  %895 = vmatpush1.msra.mxu0 %v173
  %896 = vmatprep.subr.mxu0 %v176
  %897 = vmatpush1.msra.mxu0 %v175
  %898 = vmatprep.subr.mxu0 %v178
  %899 = vmatpush1.msra.mxu0 %v177
  %900 = vmatprep.subr.mxu0 %v180
  %901 = vmatpush1.msra.mxu0 %v179
  %902 = vmatprep.subr.mxu0 %v182
  %903 = vmatpush1.msra.mxu0 %v181
  %904 = vmatprep.subr.mxu0 %v184
  %905 = vmatpush1.msra.mxu0 %v183
  %906 = vmatprep.subr.mxu0 %v186
  %907 = vmatpush1.msra.mxu0 %v185
  %908 = vmatprep.subr.mxu0 %v188
  %909 = vmatpush1.msra.mxu0 %v187
  %910 = vmatprep.subr.mxu0 %v190
  %911 = vmatpush1.msra.mxu0 %v189
  %912 = vmatprep.subr.mxu0 %v192
  %913 = vmatpush1.msra.mxu0 %v191
  %914 = vmatprep.subr.mxu0 %v194
  %915 = vmatpush1.msra.mxu0 %v193
  %916 = vmatprep.subr.mxu0 %v196
  %917 = vmatpush1.msra.mxu0 %v195
  %918 = vmatprep.subr.mxu0 %v198
  %919 = vmatpush1.msra.mxu0 %v197
  %920 = vmatprep.subr.mxu0 %v200
  %921 = vmatpush1.msra.mxu0 %v199
  %922 = vmatprep.subr.mxu0 %v202
  %923 = vmatpush1.msra.mxu0 %v201
  %924 = vmatprep.mubr.f32.mxu0 %v854
  %925 = vmatmul.mubr.f32.gmra.mrb[0].mxu0 %v853
  %v926 = vpop.f32.mrb[0].mxu0
  %v927 = vadd.f32 0.0, %v926
  %v928 = vpop.f32.mrb[0].mxu0
  %v929 = vadd.f32 0.0, %v928
  %930 = vdwg.mxu0
  %v931 = vadd.f32 %v858, %v927
  %v932 = vadd.f32 %v859, %v929
  %v933 = vmul.f32 %v54, %v931
  %v934 = vmul.f32 %v55, %v932
  %v935 = vtanh.pop %v933
  %v936 = vtanh.pop %v934
  %v937 = vmul.f32 %v54, %v935
  %v938 = vmul.f32 %v55, %v936
  %v939 = vadd.f32 %v56, %v937
  %v940 = vadd.f32 %v57, %v938
  %v941 = vmul.f32 %v939, %v855
  %v942 = vmul.f32 %v940, %v856
  %944 = vrot.lane.b32.xlu0 %v940, 96
  %v945 = vpop.permute.xlu0 %944
  %948 = vrot.lane.b32.xlu0 %v939, 96
  %v949 = vpop.permute.xlu0 %948
  %v950 = vsel %vm296, %v949, %v945
  %v953 = vsel %vm296, %v945, %v949
  %954 = vrot.lane.b32.xlu0 %v940, 64
  %v955 = vpop.permute.xlu0 %954
  %957 = vrot.lane.b32.xlu0 %v939, 64
  %v958 = vpop.permute.xlu0 %957
  %v959 = vsel %vm306, %v958, %v955
  %v962 = vsel %vm306, %v955, %v958
  %v963 = vmul.f32 %v953, %v962
  %v964 = vmul.f32 %v950, %v959
  %v965 = vadd.f32 %v941, %v963
  %v966 = vadd.f32 %v942, %v964
  %967 = vrot.lane.b32.xlu0 %v940, 32
  %v968 = vpop.permute.xlu0 %967
  %970 = vrot.lane.b32.xlu0 %v939, 32
  %v971 = vpop.permute.xlu0 %970
  %v972 = vsel %vm320, %v971, %v968
  %v975 = vsel %vm320, %v968, %v971
  %v976 = vtanh.pop %v965
  %v977 = vtanh.pop %v966
  %v978 = vmul.f32 %v975, %v976
  %v979 = vmul.f32 %v972, %v977
  %v980 = vmul.f32 %v978, %v104
  %981 = vst [vmem:[#allocation2 + $0x50] sm:$0xff] %v980
  %v982 = vmul.f32 %v978, %v134
  %v983 = vmul.f32 %v979, %v135
  %v984 = vmul.f32 %v965, %v134
  %v985 = vmul.f32 %v966, %v135
  %986 = vst [vmem:[#allocation2 + $0x28] sm:$0xff] %v983
  %v987 = vld [vmem:[%s338] sm:$0xff]
  %v988 = vld [vmem:[%s336 + $0x8] sm:$0xff]
  %989 = vmatprep.subr.mxu0 %v140
  %990 = vmatpush1.msra.mxu0 %v139
  %991 = vmatprep.subr.mxu0 %v142
  %992 = vmatpush1.msra.mxu0 %v141
  %993 = vmatprep.subr.mxu0 %v144
  %994 = vmatpush1.msra.mxu0 %v143
  %995 = vmatprep.subr.mxu0 %v146
  %996 = vmatpush1.msra.mxu0 %v145
  %997 = vmatprep.subr.mxu0 %v148
  %998 = vmatpush1.msra.mxu0 %v147
  %999 = vmatprep.subr.mxu0 %v150
  %1000 = vmatpush1.msra.mxu0 %v149
  %1001 = vmatprep.subr.mxu0 %v152
  %1002 = vmatpush1.msra.mxu0 %v151
  %1003 = vmatprep.subr.mxu0 %v154
  %1004 = vmatpush1.msra.mxu0 %v153
  %1005 = vmatprep.subr.mxu0 %v156
  %1006 = vmatpush1.msra.mxu0 %v155
  %1007 = vmatprep.subr.mxu0 %v158
  %1008 = vmatpush1.msra.mxu0 %v157
  %1009 = vmatprep.subr.mxu0 %v160
  %1010 = vmatpush1.msra.mxu0 %v159
  %1011 = vmatprep.subr.mxu0 %v162
  %1012 = vmatpush1.msra.mxu0 %v161
  %1013 = vmatprep.subr.mxu0 %v164
  %1014 = vmatpush1.msra.mxu0 %v163
  %1015 = vmatprep.subr.mxu0 %v166
  %1016 = vmatpush1.msra.mxu0 %v165
  %1017 = vmatprep.subr.mxu0 %v168
  %1018 = vmatpush1.msra.mxu0 %v167
  %1019 = vmatprep.subr.mxu0 %v170
  %1020 = vmatpush1.msra.mxu0 %v169
  %1021 = vmatprep.subr.mxu0 %v172
  %1022 = vmatpush1.msra.mxu0 %v171
  %1023 = vmatprep.subr.mxu0 %v174
  %1024 = vmatpush1.msra.mxu0 %v173
  %1025 = vmatprep.subr.mxu0 %v176
  %1026 = vmatpush1.msra.mxu0 %v175
  %1027 = vmatprep.subr.mxu0 %v178
  %1028 = vmatpush1.msra.mxu0 %v177
  %1029 = vmatprep.subr.mxu0 %v180
  %1030 = vmatpush1.msra.mxu0 %v179
  %1031 = vmatprep.subr.mxu0 %v182
  %1032 = vmatpush1.msra.mxu0 %v181
  %1033 = vmatprep.subr.mxu0 %v184
  %1034 = vmatpush1.msra.mxu0 %v183
  %1035 = vmatprep.subr.mxu0 %v186
  %1036 = vmatpush1.msra.mxu0 %v185
  %1037 = vmatprep.subr.mxu0 %v188
  %1038 = vmatpush1.msra.mxu0 %v187
  %1039 = vmatprep.subr.mxu0 %v190
  %1040 = vmatpush1.msra.mxu0 %v189
  %1041 = vmatprep.subr.mxu0 %v192
  %1042 = vmatpush1.msra.mxu0 %v191
  %1043 = vmatprep.subr.mxu0 %v194
  %1044 = vmatpush1.msra.mxu0 %v193
  %1045 = vmatprep.subr.mxu0 %v196
  %1046 = vmatpush1.msra.mxu0 %v195
  %1047 = vmatprep.subr.mxu0 %v198
  %1048 = vmatpush1.msra.mxu0 %v197
  %1049 = vmatprep.subr.mxu0 %v200
  %1050 = vmatpush1.msra.mxu0 %v199
  %1051 = vmatprep.subr.mxu0 %v202
  %1052 = vmatpush1.msra.mxu0 %v201
  %1053 = vmatprep.mubr.f32.mxu0 %v983
  %1054 = vmatmul.mubr.f32.gmra.mrb[0].mxu0 %v982
  %v1055 = vpop.f32.mrb[0].mxu0
  %v1056 = vadd.f32 0.0, %v1055
  %v1057 = vpop.f32.mrb[0].mxu0
  %v1058 = vadd.f32 0.0, %v1057
  %1059 = vdwg.mxu0
  %v1060 = vadd.f32 %v987, %v1056
  %v1061 = vadd.f32 %v988, %v1058
  %v1062 = vmul.f32 %v54, %v1060
  %v1063 = vmul.f32 %v55, %v1061
  %v1064 = vtanh.pop %v1062
  %v1065 = vtanh.pop %v1063
  %v1066 = vmul.f32 %v54, %v1064
  %v1067 = vmul.f32 %v55, %v1065
  %v1068 = vadd.f32 %v56, %v1066
  %v1069 = vadd.f32 %v57, %v1067
  %v1070 = vmul.f32 %v1068, %v984
  %v1071 = vmul.f32 %v1069, %v985
  %1073 = vrot.lane.b32.xlu0 %v1069, 96
  %v1074 = vpop.permute.xlu0 %1073
  %1077 = vrot.lane.b32.xlu0 %v1068, 96
  %v1078 = vpop.permute.xlu0 %1077
  %v1079 = vsel %vm296, %v1078, %v1074
  %v1082 = vsel %vm296, %v1074, %v1078
  %1083 = vrot.lane.b32.xlu0 %v1069, 64
  %v1084 = vpop.permute.xlu0 %1083
  %1086 = vrot.lane.b32.xlu0 %v1068, 64
  %v1087 = vpop.permute.xlu0 %1086
  %v1088 = vsel %vm306, %v1087, %v1084
  %v1091 = vsel %vm306, %v1084, %v1087
  %v1092 = vmul.f32 %v1082, %v1091
  %v1093 = vmul.f32 %v1079, %v1088
  %v1094 = vadd.f32 %v1070, %v1092
  %v1095 = vadd.f32 %v1071, %v1093
  %1096 = vrot.lane.b32.xlu0 %v1069, 32
  %v1097 = vpop.permute.xlu0 %1096
  %1099 = vrot.lane.b32.xlu0 %v1068, 32
  %v1100 = vpop.permute.xlu0 %1099
  %v1101 = vsel %vm320, %v1100, %v1097
  %v1104 = vsel %vm320, %v1097, %v1100
  %v1105 = vtanh.pop %v1094
  %v1106 = vtanh.pop %v1095
  %v1107 = vmul.f32 %v1104, %v1105
  %v1108 = vmul.f32 %v1101, %v1106
  %v1109 = vmul.f32 %v1107, %v112
  %1110 = vst [vmem:[#allocation2 + $0x60] sm:$0xff] %v1109
  %v1111 = vmul.f32 %v1107, %v136
  %v1112 = vmul.f32 %v1108, %v137
  %v1113 = vmul.f32 %v1094, %v136
  %v1114 = vmul.f32 %v1095, %v137
  %1115 = vst [vmem:[#allocation2 + $0x18] sm:$0xff] %v1112
  %v1116 = vld [vmem:[%s204] sm:$0xff]
  %v1117 = vld [vmem:[%s1 + $0x8] sm:$0xff]
  %1118 = vmatprep.subr.mxu0 %v140
  %1119 = vmatpush1.msra.mxu0 %v139
  %1120 = vmatprep.subr.mxu0 %v142
  %1121 = vmatpush1.msra.mxu0 %v141
  %1122 = vmatprep.subr.mxu0 %v144
  %1123 = vmatpush1.msra.mxu0 %v143
  %1124 = vmatprep.subr.mxu0 %v146
  %1125 = vmatpush1.msra.mxu0 %v145
  %1126 = vmatprep.subr.mxu0 %v148
  %1127 = vmatpush1.msra.mxu0 %v147
  %1128 = vmatprep.subr.mxu0 %v150
  %1129 = vmatpush1.msra.mxu0 %v149
  %1130 = vmatprep.subr.mxu0 %v152
  %1131 = vmatpush1.msra.mxu0 %v151
  %1132 = vmatprep.subr.mxu0 %v154
  %1133 = vmatpush1.msra.mxu0 %v153
  %1134 = vmatprep.subr.mxu0 %v156
  %1135 = vmatpush1.msra.mxu0 %v155
  %1136 = vmatprep.subr.mxu0 %v158
  %1137 = vmatpush1.msra.mxu0 %v157
  %1138 = vmatprep.subr.mxu0 %v160
  %1139 = vmatpush1.msra.mxu0 %v159
  %1140 = vmatprep.subr.mxu0 %v162
  %1141 = vmatpush1.msra.mxu0 %v161
  %1142 = vmatprep.subr.mxu0 %v164
  %1143 = vmatpush1.msra.mxu0 %v163
  %1144 = vmatprep.subr.mxu0 %v166
  %1145 = vmatpush1.msra.mxu0 %v165
  %1146 = vmatprep.subr.mxu0 %v168
  %1147 = vmatpush1.msra.mxu0 %v167
  %1148 = vmatprep.subr.mxu0 %v170
  %1149 = vmatpush1.msra.mxu0 %v169
  %1150 = vmatprep.subr.mxu0 %v172
  %1151 = vmatpush1.msra.mxu0 %v171
  %1152 = vmatprep.subr.mxu0 %v174
  %1153 = vmatpush1.msra.mxu0 %v173
  %1154 = vmatprep.subr.mxu0 %v176
  %1155 = vmatpush1.msra.mxu0 %v175
  %1156 = vmatprep.subr.mxu0 %v178
  %1157 = vmatpush1.msra.mxu0 %v177
  %1158 = vmatprep.subr.mxu0 %v180
  %1159 = vmatpush1.msra.mxu0 %v179
  %1160 = vmatprep.subr.mxu0 %v182
  %1161 = vmatpush1.msra.mxu0 %v181
  %1162 = vmatprep.subr.mxu0 %v184
  %1163 = vmatpush1.msra.mxu0 %v183
  %1164 = vmatprep.subr.mxu0 %v186
  %1165 = vmatpush1.msra.mxu0 %v185
  %1166 = vmatprep.subr.mxu0 %v188
  %1167 = vmatpush1.msra.mxu0 %v187
  %1168 = vmatprep.subr.mxu0 %v190
  %1169 = vmatpush1.msra.mxu0 %v189
  %1170 = vmatprep.subr.mxu0 %v192
  %1171 = vmatpush1.msra.mxu0 %v191
  %1172 = vmatprep.subr.mxu0 %v194
  %1173 = vmatpush1.msra.mxu0 %v193
  %1174 = vmatprep.subr.mxu0 %v196
  %1175 = vmatpush1.msra.mxu0 %v195
  %1176 = vmatprep.subr.mxu0 %v198
  %1177 = vmatpush1.msra.mxu0 %v197
  %1178 = vmatprep.subr.mxu0 %v200
  %1179 = vmatpush1.msra.mxu0 %v199
  %1180 = vmatprep.subr.mxu0 %v202
  %1181 = vmatpush1.msra.mxu0 %v201
  %1182 = vmatprep.mubr.f32.mxu0 %v1112
  %1183 = vmatmul.mubr.f32.gmra.mrb[0].mxu0 %v1111
  %v1184 = vpop.f32.mrb[0].mxu0
  %v1185 = vadd.f32 0.0, %v1184
  %v1186 = vpop.f32.mrb[0].mxu0
  %v1187 = vadd.f32 0.0, %v1186
  %1188 = vdwg.mxu0
  %v1189 = vadd.f32 %v1116, %v1185
  %v1190 = vadd.f32 %v1117, %v1187
  %v1191 = vmul.f32 %v54, %v1189
  %v1192 = vmul.f32 %v55, %v1190
  %v1193 = vtanh.pop %v1191
  %v1194 = vtanh.pop %v1192
  %v1195 = vmul.f32 %v54, %v1193
  %v1196 = vmul.f32 %v55, %v1194
  %v1197 = vadd.f32 %v56, %v1195
  %v1198 = vadd.f32 %v57, %v1196
  %v1199 = vmul.f32 %v1197, %v1113
  %v1200 = vmul.f32 %v1198, %v1114
  %1202 = vrot.lane.b32.xlu0 %v1198, 96
  %v1203 = vpop.permute.xlu0 %1202
  %1206 = vrot.lane.b32.xlu0 %v1197, 96
  %v1207 = vpop.permute.xlu0 %1206
  %v1208 = vsel %vm296, %v1207, %v1203
  %v1211 = vsel %vm296, %v1203, %v1207
  %1212 = vrot.lane.b32.xlu0 %v1198, 64
  %v1213 = vpop.permute.xlu0 %1212
  %1215 = vrot.lane.b32.xlu0 %v1197, 64
  %v1216 = vpop.permute.xlu0 %1215
  %v1217 = vsel %vm306, %v1216, %v1213
  %v1220 = vsel %vm306, %v1213, %v1216
  %v1221 = vmul.f32 %v1211, %v1220
  %v1222 = vmul.f32 %v1208, %v1217
  %v1223 = vadd.f32 %v1199, %v1221
  %v1224 = vadd.f32 %v1200, %v1222
  %1225 = vrot.lane.b32.xlu0 %v1198, 32
  %v1226 = vpop.permute.xlu0 %1225
  %1228 = vrot.lane.b32.xlu0 %v1197, 32
  %v1229 = vpop.permute.xlu0 %1228
  %v1230 = vsel %vm320, %v1229, %v1226
  %v1233 = vsel %vm320, %v1226, %v1229
  %v1234 = vtanh.pop %v1223
  %v1235 = vtanh.pop %v1224
  %v1236 = vmul.f32 %v1233, %v1234
  %v1237 = vmul.f32 %v1230, %v1235
  %v1238 = vmul.f32 %v1236, %v120
  %1239 = vst [vmem:[#allocation2 + $0x70] sm:$0xff] %v1238
  %v1240 = vmul.f32 %v1237, %v138
  %1241 = vst [vmem:[#allocation2 + $0x8] sm:$0xff] %v1240
  %v1242 = vld [vmem:[#allocation2] sm:$0xff]
  %v1243 = vld [vmem:[#allocation2 + $0x8] sm:$0xff]
  %v1244 = vld [vmem:[#allocation2 + $0x10] sm:$0xff]
  %v1245 = vld [vmem:[#allocation2 + $0x18] sm:$0xff]
  %v1246 = vld [vmem:[#allocation2 + $0x20] sm:$0xff]
  %v1247 = vld [vmem:[#allocation2 + $0x28] sm:$0xff]
  %v1248 = vld [vmem:[#allocation2 + $0x30] sm:$0xff]
  %v1249 = vld [vmem:[#allocation2 + $0x38] sm:$0xff]
  %v1250 = vld [vmem:[#allocation2 + $0x40] sm:$0xff]
  %v1251 = vld [vmem:[#allocation2 + $0x48] sm:$0xff]
  %v1252 = vld [vmem:[#allocation2 + $0x50] sm:$0xff]
  %v1253 = vld [vmem:[#allocation2 + $0x58] sm:$0xff]
  %v1254 = vld [vmem:[#allocation2 + $0x60] sm:$0xff]
  %v1255 = vld [vmem:[#allocation2 + $0x68] sm:$0xff]
  %v1256 = vld [vmem:[#allocation2 + $0x70] sm:$0xff]
  %v1257 = vld [vmem:[#allocation2 + $0x78] sm:$0xff]
  %v1258 = vld [vmem:[%s3] sm:$0xff]
  %v1259 = vld [vmem:[%s3 + $0x8] sm:$0xff]
  %v1260 = vld [vmem:[%s3 + $0x10] sm:$0xff]
  %v1261 = vld [vmem:[%s3 + $0x18] sm:$0xff]
  %v1262 = vld [vmem:[%s3 + $0x20] sm:$0xff]
  %v1263 = vld [vmem:[%s3 + $0x28] sm:$0xff]
  %v1264 = vld [vmem:[%s3 + $0x30] sm:$0xff]
  %v1265 = vld [vmem:[%s3 + $0x38] sm:$0xff]
  %v1266 = vld [vmem:[%s3 + $0x40] sm:$0xff]
  %v1267 = vld [vmem:[%s3 + $0x48] sm:$0xff]
  %v1268 = vld [vmem:[%s3 + $0x50] sm:$0xff]
  %v1269 = vld [vmem:[%s3 + $0x58] sm:$0xff]
  %v1270 = vld [vmem:[%s3 + $0x60] sm:$0xff]
  %v1271 = vld [vmem:[%s3 + $0x68] sm:$0xff]
  %v1272 = vld [vmem:[%s3 + $0x70] sm:$0xff]
  %v1273 = vld [vmem:[%s3 + $0x78] sm:$0xff]
  %v1274 = vld [vmem:[%s3 + $0x80] sm:$0xff]
  %v1275 = vld [vmem:[%s3 + $0x88] sm:$0xff]
  %v1276 = vld [vmem:[%s3 + $0x90] sm:$0xff]
  %v1277 = vld [vmem:[%s3 + $0x98] sm:$0xff]
  %v1278 = vld [vmem:[%s3 + $0xa0] sm:$0xff]
  %v1279 = vld [vmem:[%s3 + $0xa8] sm:$0xff]
  %v1280 = vld [vmem:[%s3 + $0xb0] sm:$0xff]
  %v1281 = vld [vmem:[%s3 + $0xb8] sm:$0xff]
  %v1282 = vld [vmem:[%s3 + $0xc0] sm:$0xff]
  %v1283 = vld [vmem:[%s3 + $0xc8] sm:$0xff]
  %v1284 = vld [vmem:[%s3 + $0xd0] sm:$0xff]
  %v1285 = vld [vmem:[%s3 + $0xd8] sm:$0xff]
  %v1286 = vld [vmem:[%s3 + $0xe0] sm:$0xff]
  %v1287 = vld [vmem:[%s3 + $0xe8] sm:$0xff]
  %v1288 = vld [vmem:[%s3 + $0xf0] sm:$0xff]
  %v1289 = vld [vmem:[%s3 + $0xf8] sm:$0xff]
  %v1290 = vld [vmem:[%s4] sm:$0x1]
  %v1292 = vlaneseq
  %v1293 = vshrl.u32 %v1292, 7
  %v1294 = vsub.s32 0, %v1293
  %v1295 = vrot.slane %v1290, %v1294
  %1297 = vmatprep.subr.mxu0 0.0
  %1298 = vmatpush1.msra.mxu0 %v1258
  %1299 = vmatprep.subr.mxu0 0.0
  %1300 = vmatpush1.msra.mxu0 %v1259
  %1301 = vmatprep.subr.mxu0 0.0
  %1302 = vmatpush1.msra.mxu0 %v1260
  %1303 = vmatprep.subr.mxu0 0.0
  %1304 = vmatpush1.msra.mxu0 %v1261
  %1305 = vmatprep.subr.mxu0 0.0
  %1306 = vmatpush1.msra.mxu0 %v1262
  %1307 = vmatprep.subr.mxu0 0.0
  %1308 = vmatpush1.msra.mxu0 %v1263
  %1309 = vmatprep.subr.mxu0 0.0
  %1310 = vmatpush1.msra.mxu0 %v1264
  %1311 = vmatprep.subr.mxu0 0.0
  %1312 = vmatpush1.msra.mxu0 %v1265
  %1313 = vmatprep.subr.mxu0 0.0
  %1314 = vmatpush1.msra.mxu0 %v1266
  %1315 = vmatprep.subr.mxu0 0.0
  %1316 = vmatpush1.msra.mxu0 %v1267
  %1317 = vmatprep.subr.mxu0 0.0
  %1318 = vmatpush1.msra.mxu0 %v1268
  %1319 = vmatprep.subr.mxu0 0.0
  %1320 = vmatpush1.msra.mxu0 %v1269
  %1321 = vmatprep.subr.mxu0 0.0
  %1322 = vmatpush1.msra.mxu0 %v1270
  %1323 = vmatprep.subr.mxu0 0.0
  %1324 = vmatpush1.msra.mxu0 %v1271
  %1325 = vmatprep.subr.mxu0 0.0
  %1326 = vmatpush1.msra.mxu0 %v1272
  %1327 = vmatprep.subr.mxu0 0.0
  %1328 = vmatpush1.msra.mxu0 %v1273
  %1329 = vmatprep.subr.mxu0 0.0
  %1330 = vmatpush1.msra.mxu0 %v1274
  %1331 = vmatprep.subr.mxu0 0.0
  %1332 = vmatpush1.msra.mxu0 %v1275
  %1333 = vmatprep.subr.mxu0 0.0
  %1334 = vmatpush1.msra.mxu0 %v1276
  %1335 = vmatprep.subr.mxu0 0.0
  %1336 = vmatpush1.msra.mxu0 %v1277
  %1337 = vmatprep.subr.mxu0 0.0
  %1338 = vmatpush1.msra.mxu0 %v1278
  %1339 = vmatprep.subr.mxu0 0.0
  %1340 = vmatpush1.msra.mxu0 %v1279
  %1341 = vmatprep.subr.mxu0 0.0
  %1342 = vmatpush1.msra.mxu0 %v1280
  %1343 = vmatprep.subr.mxu0 0.0
  %1344 = vmatpush1.msra.mxu0 %v1281
  %1345 = vmatprep.subr.mxu0 0.0
  %1346 = vmatpush1.msra.mxu0 %v1282
  %1347 = vmatprep.subr.mxu0 0.0
  %1348 = vmatpush1.msra.mxu0 %v1283
  %1349 = vmatprep.subr.mxu0 0.0
  %1350 = vmatpush1.msra.mxu0 %v1284
  %1351 = vmatprep.subr.mxu0 0.0
  %1352 = vmatpush1.msra.mxu0 %v1285
  %1353 = vmatprep.subr.mxu0 0.0
  %1354 = vmatpush1.msra.mxu0 %v1286
  %1355 = vmatprep.subr.mxu0 0.0
  %1356 = vmatpush1.msra.mxu0 %v1287
  %1357 = vmatprep.subr.mxu0 0.0
  %1358 = vmatpush1.msra.mxu0 %v1288
  %1359 = vmatprep.subr.mxu0 0.0
  %1360 = vmatpush1.msra.mxu0 %v1289
  %1361 = vmatprep.mubr.f32.mxu0 %v1243
  %1362 = vmatmul.mubr.f32.gmra.mrb[0].mxu0 %v1242
  %v1363 = vpop.f32.mrb[0].mxu0
  %v1364 = vadd.f32 %v1295, %v1363
  %v1365 = vpop.f32.mrb[0].mxu0
  %1366 = vmatprep.mubr.f32.mxu0 %v1245
  %1367 = vmatmul.mubr.f32.gmra.mrb[0].mxu0 %v1244
  %v1368 = vpop.f32.mrb[0].mxu0
  %v1369 = vadd.f32 %v1295, %v1368
  %v1370 = vpop.f32.mrb[0].mxu0
  %1371 = vmatprep.mubr.f32.mxu0 %v1247
  %1372 = vmatmul.mubr.f32.gmra.mrb[0].mxu0 %v1246
  %v1373 = vpop.f32.mrb[0].mxu0
  %v1374 = vadd.f32 %v1295, %v1373
  %v1375 = vpop.f32.mrb[0].mxu0
  %1376 = vmatprep.mubr.f32.mxu0 %v1249
  %1377 = vmatmul.mubr.f32.gmra.mrb[0].mxu0 %v1248
  %v1378 = vpop.f32.mrb[0].mxu0
  %v1379 = vadd.f32 %v1295, %v1378
  %v1380 = vpop.f32.mrb[0].mxu0
  %1381 = vmatprep.mubr.f32.mxu0 %v1251
  %1382 = vmatmul.mubr.f32.gmra.mrb[0].mxu0 %v1250
  %v1383 = vpop.f32.mrb[0].mxu0
  %v1384 = vadd.f32 %v1295, %v1383
  %v1385 = vpop.f32.mrb[0].mxu0
  %1386 = vmatprep.mubr.f32.mxu0 %v1253
  %1387 = vmatmul.mubr.f32.gmra.mrb[0].mxu0 %v1252
  %v1388 = vpop.f32.mrb[0].mxu0
  %v1389 = vadd.f32 %v1295, %v1388
  %v1390 = vpop.f32.mrb[0].mxu0
  %1391 = vmatprep.mubr.f32.mxu0 %v1255
  %1392 = vmatmul.mubr.f32.gmra.mrb[0].mxu0 %v1254
  %v1393 = vpop.f32.mrb[0].mxu0
  %v1394 = vadd.f32 %v1295, %v1393
  %v1395 = vpop.f32.mrb[0].mxu0
  %1396 = vmatprep.mubr.f32.mxu0 %v1257
  %1397 = vmatmul.mubr.f32.gmra.mrb[0].mxu0 %v1256
  %v1398 = vpop.f32.mrb[0].mxu0
  %v1399 = vadd.f32 %v1295, %v1398
  %v1400 = vpop.f32.mrb[0].mxu0
  %1401 = vdwg.mxu0
  %v1402 = vmax.f32 %v1364, %v1369
  %v1403 = vmax.f32 %v1402, %v1374
  %v1404 = vmax.f32 %v1403, %v1379
  %v1405 = vmax.f32 %v1404, %v1384
  %v1406 = vmax.f32 %v1405, %v1389
  %v1407 = vmax.f32 %v1406, %v1394
  %v1408 = vmax.f32 %v1407, %v1399
  %v1409 = vsub.f32 %v1364, %v1408
  %v1410 = vmul.f32 %v1409, 1.442695
  %v1411 = vpow.pop %v1410
  %v1412 = vadd.f32 %v1411, 0.0
  %v1413 = vsub.f32 %v1369, %v1408
  %v1414 = vmul.f32 %v1413, 1.442695
  %v1415 = vpow.pop %v1414
  %v1416 = vadd.f32 %v1412, %v1415
  %v1417 = vsub.f32 %v1374, %v1408
  %v1418 = vmul.f32 %v1417, 1.442695
  %v1419 = vpow.pop %v1418
  %v1420 = vadd.f32 %v1416, %v1419
  %v1421 = vsub.f32 %v1379, %v1408
  %v1422 = vmul.f32 %v1421, 1.442695
  %v1423 = vpow.pop %v1422
  %v1424 = vadd.f32 %v1420, %v1423
  %v1425 = vsub.f32 %v1384, %v1408
  %v1426 = vmul.f32 %v1425, 1.442695
  %v1427 = vpow.pop %v1426
  %v1428 = vadd.f32 %v1424, %v1427
  %v1429 = vsub.f32 %v1389, %v1408
  %v1430 = vmul.f32 %v1429, 1.442695
  %v1431 = vpow.pop %v1430
  %v1432 = vadd.f32 %v1428, %v1431
  %v1433 = vsub.f32 %v1394, %v1408
  %v1434 = vmul.f32 %v1433, 1.442695
  %v1435 = vpow.pop %v1434
  %v1436 = vadd.f32 %v1432, %v1435
  %v1437 = vsub.f32 %v1399, %v1408
  %v1438 = vmul.f32 %v1437, 1.442695
  %v1439 = vpow.pop %v1438
  %v1440 = vadd.f32 %v1436, %v1439
  %v1441 = vlog2.pop %v1440
  %v1442 = vmul.f32 %v1441, 0.6931472
  %v1443 = vadd.f32 %v1442, %v1408
  %v1444 = vsub.f32 %v1364, %v1443
  %1445 = vst [vmem:[%s5] sm:$0xff] %v1444
  %v1446 = vsub.f32 %v1369, %v1443
  %s1447 = scalar_lea.vmem %s5, 8
  %1448 = vst [vmem:[%s1447] sm:$0xff] %v1446
  %v1449 = vsub.f32 %v1374, %v1443
  %s1450 = scalar_lea.vmem %s5, 16
  %1451 = vst [vmem:[%s1450] sm:$0xff] %v1449
  %v1452 = vsub.f32 %v1379, %v1443
  %s1453 = scalar_lea.vmem %s5, 24
  %1454 = vst [vmem:[%s1453] sm:$0xff] %v1452
  %v1455 = vsub.f32 %v1384, %v1443
  %s1456 = scalar_lea.vmem %s5, 32
  %1457 = vst [vmem:[%s1456] sm:$0xff] %v1455
  %v1458 = vsub.f32 %v1389, %v1443
  %s1459 = scalar_lea.vmem %s5, 40
  %1460 = vst [vmem:[%s1459] sm:$0xff] %v1458
  %v1461 = vsub.f32 %v1394, %v1443
  %s1462 = scalar_lea.vmem %s5, 48
  %1463 = vst [vmem:[%s1462] sm:$0xff] %v1461
  %v1464 = vsub.f32 %v1399, %v1443
  %s1465 = scalar_lea.vmem %s5, 56
  %1466 = vst [vmem:[%s1465] sm:$0xff] %v1464
  // Predicated region
  $region22: #{bilstm_forward.1} parent=0 // pred_check
    _
  $region23: #{bilstm_forward.1} parent=0 // pred_check_branch
    %1468 = sbr.rel (0) target = $region25
  $region24: #{bilstm_forward.1} parent=0 // pred_region
    _
  $region25: #{bilstm_forward.1} parent=0 // pred_fallthru
    _
  // Predicated region
  $region26: #{bilstm_forward.1} parent=0 // pred_check
    _
  $region27: #{bilstm_forward.1} parent=0 // pred_check_branch
    %1470 = sbr.rel (0) target = $region29
  $region28: #{bilstm_forward.1} parent=0 // pred_region
    _
  $region29: #{bilstm_forward.1} parent=0 // pred_fallthru
    _

</llo_original>
